<compile_context>
chip_gen: v5e
topology: v5e:2x2
jax: 0.10.0
libtpu: 0.0.40
codegen_flags: <defaults>
</compile_context>

<pallas_src>
import functools
import math

import jax
import jax.numpy as jnp
from jax import lax
from jax.experimental import pallas as pl
from jax.experimental.pallas import tpu as pltpu


def _round_up(n, m):
    return ((n + m - 1) // m) * m


def _pick_tile(s, cap=512):
    """Largest divisor of s that is <= cap and a multiple of 8 (or s if small)."""
    if s <= cap:
        return s
    for t in range(cap, 7, -1):
        if s % t == 0 and t % 8 == 0:
            return t
    # TODO(synk): pad S to a multiple of 256 with masked rows instead of falling
    # back to a whole-sequence tile for awkward sequence lengths.
    return s


def _layernorm(x, eps, n_valid):
    """Matches LayerNorm_torch.forward (gamma/beta unused there, unbiased=False).

    x may carry zero-padded trailing columns; statistics divide by the true
    feature count n_valid and padded columns are re-zeroed on output.
    """
    d_pad = x.shape[-1]
    inv_n = 1.0 / n_valid
    mean = jnp.sum(x, axis=-1, keepdims=True) * inv_n      # pads are zero => exact
    xc = x - mean
    if n_valid != d_pad:
        colmask = lax.broadcasted_iota(jnp.int32, (1, d_pad), 1) < n_valid
        xc = xc * colmask.astype(x.dtype)                   # also re-zeroes pads
    var = jnp.sum(xc * xc, axis=-1, keepdims=True) * inv_n
    return xc * lax.rsqrt(var + eps)


def encoder_layer_kernel(
    xq_ref, xkv_ref, bias_ref,
    wq_ref, bq_ref, wk_ref, bk_ref, wv_ref, bv_ref, wo_ref, bo_ref,
    w1_ref, b1_ref, w2_ref, b2_ref,
    o_ref,
    k_scr, v_scr,
    *, n_heads, dh_pad, d_true, scale, eps, kv_chunk, exp_in_bf16, compute_dtype,
):
    f32 = jnp.float32
    cd = compute_dtype
    qi = pl.program_id(1)

    TQ = xq_ref.shape[1]
    S = xkv_ref.shape[1]
    DH = n_heads * dh_pad

    # --- K/V projections: once per batch row (qi == 0), cached in VMEM scratch in
    #     (head, seq, dh) layout and reused for every query tile of this row.
    @pl.when(qi == 0)
    def _():
        xf = xkv_ref[0]                                      # (S, D_pad), compute dtype
        k = jnp.dot(xf, wk_ref[...], preferred_element_type=f32) + bk_ref[0]
        v = jnp.dot(xf, wv_ref[...], preferred_element_type=f32) + bv_ref[0]
        k_scr[...] = jnp.transpose(k.reshape(S, n_heads, dh_pad), (1, 0, 2)).astype(cd)
        v_scr[...] = jnp.transpose(v.reshape(S, n_heads, dh_pad), (1, 0, 2)).astype(cd)

    xq = xq_ref[0]                                           # (TQ, D_pad) f32 residual
    q = jnp.dot(xq.astype(cd), wq_ref[...], preferred_element_type=f32) + bq_ref[0]
    q = q * jnp.float32(scale)                               # fold softmax scale into Q
    qh = jnp.transpose(q.reshape(TQ, n_heads, dh_pad), (1, 0, 2)).astype(cd)

    bias = bias_ref[0, 0].astype(f32)                        # (TQ, S) additive mask bias

    # --- flash-style attention over KV chunks (bounded VMEM working set) -------
    num_chunks = S // kv_chunk                               # static trip count
    m = jnp.full((n_heads, TQ, 1), -jnp.inf, f32)
    l = jnp.zeros((n_heads, TQ, 1), f32)
    acc = jnp.zeros((n_heads, TQ, dh_pad), f32)
    for c in range(num_chunks):
        lo = c * kv_chunk
        ks = k_scr[:, lo:lo + kv_chunk, :]
        vs = v_scr[:, lo:lo + kv_chunk, :]
        s = jnp.einsum("hqd,hkd->hqk", qh, ks, preferred_element_type=f32)
        s = s + bias[None, :, lo:lo + kv_chunk]
        m_new = jnp.maximum(m, jnp.max(s, axis=-1, keepdims=True))
        alpha = jnp.exp(m - m_new)
        sm = s - m_new                                       # max subtracted in f32
        p = jnp.exp(sm.astype(jnp.bfloat16)) if exp_in_bf16 else jnp.exp(sm)
        l = alpha * l + jnp.sum(p, axis=-1, keepdims=True, dtype=f32)
        acc = alpha * acc + jnp.einsum("hqk,hkd->hqd", p.astype(cd), vs,
                                       preferred_element_type=f32)
        m = m_new

    inv = pl.reciprocal(l, approx=True)                      # EUP seed + 1 NR step
    inv = inv * (2.0 - l * inv)
    ctx = (acc * inv).astype(cd)                             # (nh, TQ, dh_pad)
    ctx = jnp.transpose(ctx, (1, 0, 2)).reshape(TQ, DH)

    attn = jnp.dot(ctx, wo_ref[...], preferred_element_type=f32) + bo_ref[0]

    # TODO(synk): dropout1/dropout2 are identity (eval mode); no RNG applied.
    x1 = _layernorm(attn + xq, eps, d_true)

    h1 = jnp.dot(x1.astype(cd), w1_ref[...], preferred_element_type=f32) + b1_ref[0]
    h1 = jnp.maximum(h1, 0.0)
    ffn = jnp.dot(h1.astype(cd), w2_ref[...], preferred_element_type=f32) + b2_ref[0]

    out = _layernorm(ffn + x1, eps, d_true)
    o_ref[0] = out.astype(o_ref.dtype)


def _vmem_capacity_bytes():
    try:
        return int(pltpu.get_tpu_info().vmem_capacity_bytes)
    except Exception:
        return 64 << 20   # conservative (v7x per-core physical VMEM)


def encoder_layer(x, src_mask, params, *, n_heads, d_k, eps=1e-12,
                  compute_dtype=jnp.bfloat16, tq=None, kv_chunk=None,
                  exp_in_bf16=None):
    """x: (B, S, D) f32; src_mask: (B, 1, S, S) (0 => masked)."""
    B, S, D = x.shape
    assert D % n_heads == 0
    dh = D // n_heads
    H = params["w1"].shape[1]
    cd = jnp.dtype(compute_dtype)

    # Lane-dense padding: model dim, per-head dim and FFN hidden to multiples of 128.
    D_pad = _round_up(D, 128)
    dh_pad = _round_up(dh, 128)
    DH = n_heads * dh_pad
    H_pad = _round_up(H, 128)

    TQ = _pick_tile(S) if tq is None else tq
    assert S % TQ == 0 and (TQ == S or TQ % 8 == 0)
    NQ = S // TQ
    CK = _pick_tile(S) if kv_chunk is None else kv_chunk
    assert S % CK == 0

    if exp_in_bf16 is None:
        # bf16 exp halves EUP pressure on v6e/v7x; on v5e (no bf16 EUP) pass
        # exp_in_bf16=False, or use compute_dtype=jnp.float32.
        exp_in_bf16 = (cd == jnp.dtype(jnp.bfloat16))

    scale = 1.0 / math.sqrt(d_k / n_heads)

    # --- wrapper-side padding / layout prep (zero pads keep the math exact) ----
    # TODO(synk): in a real model pad the weights once at load time, not per call.
    def pad_head_out(w):   # (D, D) -> (D_pad, n_heads*dh_pad), head-major cols
        w = jnp.pad(w, ((0, D_pad - D), (0, 0)))
        w = w.reshape(D_pad, n_heads, dh)
        w = jnp.pad(w, ((0, 0), (0, 0), (0, dh_pad - dh)))
        return w.reshape(D_pad, DH)

    def pad_head_bias(b):  # (1, D) -> (1, n_heads*dh_pad)
        b = b.reshape(1, n_heads, dh)
        b = jnp.pad(b, ((0, 0), (0, 0), (0, dh_pad - dh)))
        return b.reshape(1, DH)

    def pad_head_in(w):    # (D, D) -> (n_heads*dh_pad, D_pad)
        w = jnp.pad(w, ((0, 0), (0, D_pad - D)))
        w = w.reshape(n_heads, dh, D_pad)
        w = jnp.pad(w, ((0, 0), (0, dh_pad - dh), (0, 0)))
        return w.reshape(DH, D_pad)

    x_pad = jnp.pad(x, ((0, 0), (0, 0), (0, D_pad - D)))
    x_kv = x_pad.astype(cd)                       # K/V path only needs compute dtype
    # Additive mask bias shipped as bf16: half the HBM bytes of an f32 mask and no
    # in-kernel compare/select.
    bias = jnp.where(src_mask == 0, jnp.float32(-1e9),
                     jnp.float32(0.0)).astype(jnp.bfloat16)

    wq = pad_head_out(params["wq"]).astype(cd)
    wk = pad_head_out(params["wk"]).astype(cd)
    wv = pad_head_out(params["wv"]).astype(cd)
    bq = pad_head_bias(params["bq"])
    bk = pad_head_bias(params["bk"])
    bv = pad_head_bias(params["bv"])
    wo = pad_head_in(params["wo"]).astype(cd)
    bo = jnp.pad(params["bo"], ((0, 0), (0, D_pad - D)))
    w1 = jnp.pad(params["w1"], ((0, D_pad - D), (0, H_pad - H))).astype(cd)
    b1 = jnp.pad(params["b1"], ((0, 0), (0, H_pad - H)))
    w2 = jnp.pad(params["w2"], ((0, H_pad - H), (0, D_pad - D))).astype(cd)
    b2 = jnp.pad(params["b2"], ((0, 0), (0, D_pad - D)))

    def wspec(shape):
        # TODO(synk): on v7x, single-buffer these constant-index weight blocks
        # (pipeline_mode=pl.Buffered(1)) to halve the resident weight footprint.
        return pl.BlockSpec(shape, lambda b, qi: (0, 0))

    in_specs = [
        pl.BlockSpec((1, TQ, D_pad), lambda b, qi: (b, qi, 0)),    # x query tile (f32)
        pl.BlockSpec((1, S, D_pad), lambda b, qi: (b, 0, 0)),      # x full seq (cd)
        pl.BlockSpec((1, 1, TQ, S), lambda b, qi: (b, 0, qi, 0)),  # additive mask bias
        wspec((D_pad, DH)), wspec((1, DH)),                        # W_q, b_q
        wspec((D_pad, DH)), wspec((1, DH)),                        # W_k, b_k
        wspec((D_pad, DH)), wspec((1, DH)),                        # W_v, b_v
        wspec((DH, D_pad)), wspec((1, D_pad)),                     # W_o, b_o
        wspec((D_pad, H_pad)), wspec((1, H_pad)),                  # linear1
        wspec((H_pad, D_pad)), wspec((1, D_pad)),                  # linear2
    ]
    out_specs = pl.BlockSpec((1, TQ, D_pad), lambda b, qi: (b, qi, 0))

    # VMEM budget: double-buffered blocks counted 2x; cap per TPU generation
    # (128 MiB on v5e/v6e, 64 MiB per core on v7x).
    cdb = cd.itemsize
    w_bytes = (3 * D_pad * DH + DH * D_pad + 2 * D_pad * H_pad) * cdb \
              + (3 * DH + 2 * D_pad + H_pad) * 4
    act_bytes = 2 * (TQ * D_pad * 4) + 2 * (S * D_pad * cdb) + 2 * (TQ * S * 2) \
                + 2 * (TQ * D_pad * 4)
    scr_bytes = 2 * n_heads * S * dh_pad * cdb
    inter_bytes = 4 * n_heads * TQ * CK * 4 + 2 * n_heads * TQ * dh_pad * 4 \
                  + 2 * TQ * DH * 4 + 2 * TQ * H_pad * 4 + 2 * S * DH * 4
    est = 2 * w_bytes + act_bytes + scr_bytes + inter_bytes
    vmem_cap = _vmem_capacity_bytes()
    vmem_limit = int(min(int(0.9 * vmem_cap), max(32 << 20, 2 * est)))
    # TODO(synk): for very large FFN hidden dims, additionally tile H_pad.

    kernel = functools.partial(
        encoder_layer_kernel, n_heads=n_heads, dh_pad=dh_pad, d_true=D,
        scale=scale, eps=eps, kv_chunk=CK, exp_in_bf16=exp_in_bf16,
        compute_dtype=cd)

    # TODO(synk): if B == 1 on v7x (2 TensorCores), split the query-tile axis into
    # an outer "parallel" axis of 2 (recomputing K/V once per core) to fill both.
    out_pad = pl.pallas_call(
        kernel,
        out_shape=jax.ShapeDtypeStruct((B, S, D_pad), x.dtype),
        grid_spec=pltpu.PrefetchScalarGridSpec(
            num_scalar_prefetch=0,
            grid=(B, NQ),
            in_specs=in_specs,
            out_specs=out_specs,
            scratch_shapes=[pltpu.VMEM((n_heads, S, dh_pad), cd),
                            pltpu.VMEM((n_heads, S, dh_pad), cd)],
        ),
        compiler_params=pltpu.CompilerParams(
            dimension_semantics=("parallel", "arbitrary"),
            vmem_limit_bytes=vmem_limit,
        ),
    )(x_pad, x_kv, bias, wq, bq, wk, bk, wv, bv, wo, bo, w1, b1, w2, b2)

    return out_pad[..., :D]


def init_params(key, d_model, ffn_hidden):
    ks = jax.random.split(key, 12)
    s = 0.05
    return {
        "wq": jax.random.normal(ks[0], (d_model, d_model), jnp.float32) * s,
        "bq": jax.random.normal(ks[1], (1, d_model), jnp.float32) * s,
        "wk": jax.random.normal(ks[2], (d_model, d_model), jnp.float32) * s,
        "bk": jax.random.normal(ks[3], (1, d_model), jnp.float32) * s,
        "wv": jax.random.normal(ks[4], (d_model, d_model), jnp.float32) * s,
        "bv": jax.random.normal(ks[5], (1, d_model), jnp.float32) * s,
        "wo": jax.random.normal(ks[6], (d_model, d_model), jnp.float32) * s,
        "bo": jax.random.normal(ks[7], (1, d_model), jnp.float32) * s,
        "w1": jax.random.normal(ks[8], (d_model, ffn_hidden), jnp.float32) * s,
        "b1": jax.random.normal(ks[9], (1, ffn_hidden), jnp.float32) * s,
        "w2": jax.random.normal(ks[10], (ffn_hidden, d_model), jnp.float32) * s,
        "b2": jax.random.normal(ks[11], (1, d_model), jnp.float32) * s,
    }


def _reference(x, mask, p, n_heads, d_k, eps=1e-12):
    B, S, D = x.shape
    dh = D // n_heads
    q = x @ p["wq"] + p["bq"][0]
    k = x @ p["wk"] + p["bk"][0]
    v = x @ p["wv"] + p["bv"][0]
    split = lambda t: t.reshape(B, S, n_heads, dh).transpose(0, 2, 1, 3)
    qh, kh, vh = split(q), split(k), split(v)
    scores = jnp.einsum("bhqd,bhkd->bhqk", qh, kh) / jnp.sqrt(
        jnp.float32(d_k / n_heads))
    scores = jnp.where(mask == 0, -1e9, scores)
    probs = jax.nn.softmax(scores, axis=-1)
    attn = jnp.einsum("bhqk,bhkd->bhqd", probs, vh)
    attn = attn.transpose(0, 2, 1, 3).reshape(B, S, D) @ p["wo"] + p["bo"][0]

    def ln(t):
        m = t.mean(-1, keepdims=True)
        var = ((t - m) ** 2).mean(-1, keepdims=True)
        return (t - m) / jnp.sqrt(var + eps)

    x1 = ln(attn + x)
    ffn = jnp.maximum(x1 @ p["w1"] + p["b1"][0], 0.0) @ p["w2"] + p["b2"][0]
    return ln(ffn + x1)


if __name__ == "__main__":
    # Tiny config: B=2, S=8, d_model=32, n_heads=4, ffn_hidden=64.
    B, S, D = 2, 8, 32
    n_heads, d_k, ffn_hidden = 4, 32, 64

    key = jax.random.PRNGKey(0)
    kx, km, kp = jax.random.split(key, 3)
    x = jax.random.normal(kx, (B, S, D), jnp.float32)
    src_mask = (jax.random.uniform(km, (B, 1, S, S)) > 0.2).astype(jnp.float32)
    params = init_params(kp, D, ffn_hidden)

    ref = _reference(x, src_mask, params, n_heads, d_k)

    # f32 compute path: tight correctness check.
    out_f32 = encoder_layer(x, src_mask, params, n_heads=n_heads, d_k=d_k,
                            compute_dtype=jnp.float32)
    out_f32 = jax.block_until_ready(out_f32)
    assert out_f32.shape == (B, S, D)
    assert jnp.allclose(out_f32, ref, atol=2e-4, rtol=2e-4), (
        float(jnp.max(jnp.abs(out_f32 - ref))))

    # bf16 matmul operands + bf16 softmax exp (f32 accumulation): perf path.
    out_bf16 = encoder_layer(x, src_mask, params, n_heads=n_heads, d_k=d_k,
                             compute_dtype=jnp.bfloat16)
    out_bf16 = jax.block_until_ready(out_bf16)
    assert jnp.allclose(out_bf16, ref, atol=4e-2, rtol=4e-2), (
        float(jnp.max(jnp.abs(out_bf16 - ref))))

    # Larger config exercising K/V-cache reuse across query tiles (NQ=2) and the
    # multi-chunk flash-softmax path (2 KV chunks).
    B2, S2, D2 = 2, 256, 64
    nh2, dk2, ffn2 = 4, 64, 128
    k2a, k2b, k2c = jax.random.split(jax.random.PRNGKey(0), 3)
    x2 = jax.random.normal(k2a, (B2, S2, D2), jnp.float32)
    mask2 = (jax.random.uniform(k2b, (B2, 1, S2, S2)) > 0.2).astype(jnp.float32)
    p2 = init_params(k2c, D2, ffn2)
    ref2 = _reference(x2, mask2, p2, nh2, dk2)
    out2 = encoder_layer(x2, mask2, p2, n_heads=nh2, d_k=dk2,
                         compute_dtype=jnp.float32, tq=128, kv_chunk=128)
    out2 = jax.block_until_ready(out2)
    assert jnp.allclose(out2, ref2, atol=2e-3, rtol=2e-3), (
        float(jnp.max(jnp.abs(out2 - ref2))))

    print("KERNEL_OK")
</pallas_src>

<mosaic_0001>
module attributes {stable_mosaic.version = 11 : i64} {
  func.func @encoder_layer_kernel(%arg0: i32, %arg1: i32, %arg2: memref<1x8x128xf32, #tpu.memory_space<vmem>>, %arg3: memref<1x8x128xf32, #tpu.memory_space<vmem>>, %arg4: memref<1x1x8x8xbf16, #tpu.memory_space<vmem>>, %arg5: memref<128x512xf32, #tpu.memory_space<vmem>>, %arg6: memref<1x512xf32, #tpu.memory_space<vmem>>, %arg7: memref<128x512xf32, #tpu.memory_space<vmem>>, %arg8: memref<1x512xf32, #tpu.memory_space<vmem>>, %arg9: memref<128x512xf32, #tpu.memory_space<vmem>>, %arg10: memref<1x512xf32, #tpu.memory_space<vmem>>, %arg11: memref<512x128xf32, #tpu.memory_space<vmem>>, %arg12: memref<1x128xf32, #tpu.memory_space<vmem>>, %arg13: memref<128x128xf32, #tpu.memory_space<vmem>>, %arg14: memref<1x128xf32, #tpu.memory_space<vmem>>, %arg15: memref<128x128xf32, #tpu.memory_space<vmem>>, %arg16: memref<1x128xf32, #tpu.memory_space<vmem>>, %arg17: memref<1x8x128xf32, #tpu.memory_space<vmem>>, %arg18: memref<4x8x128xf32, #tpu.memory_space<vmem>>, %arg19: memref<4x8x128xf32, #tpu.memory_space<vmem>>) attributes {dimension_semantics = [#tpu.dimension_semantics<parallel>, #tpu.dimension_semantics<arbitrary>], iteration_bounds = array<i64: 2, 1>, scalar_prefetch = 0 : i64, scratch_operands = 2 : i64, tpu.core_type = #tpu.core_type<tc>, window_params = [{transform_indices = @transform_0, window_bounds = array<i64: 1, 8, 128>}, {transform_indices = @transform_1, window_bounds = array<i64: 1, 8, 128>}, {transform_indices = @transform_2, window_bounds = array<i64: 1, 1, 8, 8>}, {pipeline_mode = #tpu.pipeline_mode<synchronous>, transform_indices = @transform_3, window_bounds = array<i64: 128, 512>}, {pipeline_mode = #tpu.pipeline_mode<synchronous>, transform_indices = @transform_4, window_bounds = array<i64: 1, 512>}, {pipeline_mode = #tpu.pipeline_mode<synchronous>, transform_indices = @transform_5, window_bounds = array<i64: 128, 512>}, {pipeline_mode = #tpu.pipeline_mode<synchronous>, transform_indices = @transform_6, window_bounds = array<i64: 1, 512>}, {pipeline_mode = #tpu.pipeline_mode<synchronous>, transform_indices = @transform_7, window_bounds = array<i64: 128, 512>}, {pipeline_mode = #tpu.pipeline_mode<synchronous>, transform_indices = @transform_8, window_bounds = array<i64: 1, 512>}, {pipeline_mode = #tpu.pipeline_mode<synchronous>, transform_indices = @transform_9, window_bounds = array<i64: 512, 128>}, {pipeline_mode = #tpu.pipeline_mode<synchronous>, transform_indices = @transform_10, window_bounds = array<i64: 1, 128>}, {pipeline_mode = #tpu.pipeline_mode<synchronous>, transform_indices = @transform_11, window_bounds = array<i64: 128, 128>}, {pipeline_mode = #tpu.pipeline_mode<synchronous>, transform_indices = @transform_12, window_bounds = array<i64: 1, 128>}, {pipeline_mode = #tpu.pipeline_mode<synchronous>, transform_indices = @transform_13, window_bounds = array<i64: 128, 128>}, {pipeline_mode = #tpu.pipeline_mode<synchronous>, transform_indices = @transform_14, window_bounds = array<i64: 1, 128>}, {transform_indices = @transform_15, window_bounds = array<i64: 1, 8, 128>}]} {
    %c0_i32 = arith.constant 0 : i32
    %0 = arith.cmpi eq, %arg1, %c0_i32 : i32
    %1 = arith.extui %0 : i1 to i32
    %c0_i32_0 = arith.constant 0 : i32
    %2 = arith.cmpi ne, %1, %c0_i32_0 : i32
    scf.if %2 {
      %c0_56 = arith.constant 0 : index
      %c0_57 = arith.constant 0 : index
      %c0_58 = arith.constant 0 : index
      %127 = vector.load %arg3[%c0_56, %c0_57, %c0_58] : memref<1x8x128xf32, #tpu.memory_space<vmem>>, vector<1x8x128xf32>
      %128 = vector.shape_cast %127 : vector<1x8x128xf32> to vector<8x128xf32>
      %c0_59 = arith.constant 0 : index
      %c0_60 = arith.constant 0 : index
      %129 = vector.load %arg7[%c0_59, %c0_60] : memref<128x512xf32, #tpu.memory_space<vmem>>, vector<128x512xf32>
      %cst_61 = arith.constant dense<0.000000e+00> : vector<8x512xf32>
      %130 = tpu.matmul %128, %129, %cst_61 {dimension_numbers = #tpu.dot_dimension_numbers<[1], [0], [0], [1], [0, 0, 1, 1], [], []>} : vector<8x128xf32>, vector<128x512xf32>, vector<8x512xf32> -> vector<8x512xf32>
      %c0_62 = arith.constant 0 : index
      %c0_63 = arith.constant 0 : index
      %131 = vector.load %arg8[%c0_62, %c0_63] : memref<1x512xf32, #tpu.memory_space<vmem>>, vector<1x512xf32>
      %132 = vector.shape_cast %131 : vector<1x512xf32> to vector<512xf32>
      %133 = vector.shape_cast %132 : vector<512xf32> to vector<1x512xf32>
      %134 = vector.broadcast %133 : vector<1x512xf32> to vector<8x512xf32>
      %135 = arith.addf %130, %134 : vector<8x512xf32>
      %c0_64 = arith.constant 0 : index
      %c0_65 = arith.constant 0 : index
      %136 = vector.load %arg9[%c0_64, %c0_65] : memref<128x512xf32, #tpu.memory_space<vmem>>, vector<128x512xf32>
      %cst_66 = arith.constant dense<0.000000e+00> : vector<8x512xf32>
      %137 = tpu.matmul %128, %136, %cst_66 {dimension_numbers = #tpu.dot_dimension_numbers<[1], [0], [0], [1], [0, 0, 1, 1], [], []>} : vector<8x128xf32>, vector<128x512xf32>, vector<8x512xf32> -> vector<8x512xf32>
      %c0_67 = arith.constant 0 : index
      %c0_68 = arith.constant 0 : index
      %138 = vector.load %arg10[%c0_67, %c0_68] : memref<1x512xf32, #tpu.memory_space<vmem>>, vector<1x512xf32>
      %139 = vector.shape_cast %138 : vector<1x512xf32> to vector<512xf32>
      %140 = vector.shape_cast %139 : vector<512xf32> to vector<1x512xf32>
      %141 = vector.broadcast %140 : vector<1x512xf32> to vector<8x512xf32>
      %142 = arith.addf %137, %141 : vector<8x512xf32>
      %143 = vector.shape_cast %135 : vector<8x512xf32> to vector<8x4x128xf32>
      %144 = tpu.transpose %143, [1, 0, 2] : vector<8x4x128xf32> -> vector<4x8x128xf32>
      %c0_69 = arith.constant 0 : index
      %c0_70 = arith.constant 0 : index
      %c0_71 = arith.constant 0 : index
      %145 = vector.load %arg18[%c0_69, %c0_70, %c0_71] : memref<4x8x128xf32, #tpu.memory_space<vmem>>, vector<4x8x128xf32>
      tpu.vector_store %arg18[%c0_69, %c0_70, %c0_71], %144 {strides = array<i32>} : memref<4x8x128xf32, #tpu.memory_space<vmem>>, vector<4x8x128xf32>,
      %146 = vector.shape_cast %142 : vector<8x512xf32> to vector<8x4x128xf32>
      %147 = tpu.transpose %146, [1, 0, 2] : vector<8x4x128xf32> -> vector<4x8x128xf32>
      %c0_72 = arith.constant 0 : index
      %c0_73 = arith.constant 0 : index
      %c0_74 = arith.constant 0 : index
      %148 = vector.load %arg19[%c0_72, %c0_73, %c0_74] : memref<4x8x128xf32, #tpu.memory_space<vmem>>, vector<4x8x128xf32>
      tpu.vector_store %arg19[%c0_72, %c0_73, %c0_74], %147 {strides = array<i32>} : memref<4x8x128xf32, #tpu.memory_space<vmem>>, vector<4x8x128xf32>,
    } else {
    }
    %c0 = arith.constant 0 : index
    %c0_1 = arith.constant 0 : index
    %c0_2 = arith.constant 0 : index
    %3 = vector.load %arg2[%c0, %c0_1, %c0_2] : memref<1x8x128xf32, #tpu.memory_space<vmem>>, vector<1x8x128xf32>
    %4 = vector.shape_cast %3 : vector<1x8x128xf32> to vector<8x128xf32>
    %c0_3 = arith.constant 0 : index
    %c0_4 = arith.constant 0 : index
    %5 = vector.load %arg5[%c0_3, %c0_4] : memref<128x512xf32, #tpu.memory_space<vmem>>, vector<128x512xf32>
    %cst = arith.constant dense<0.000000e+00> : vector<8x512xf32>
    %6 = tpu.matmul %4, %5, %cst {dimension_numbers = #tpu.dot_dimension_numbers<[1], [0], [0], [1], [0, 0, 1, 1], [], []>} : vector<8x128xf32>, vector<128x512xf32>, vector<8x512xf32> -> vector<8x512xf32>
    %c0_5 = arith.constant 0 : index
    %c0_6 = arith.constant 0 : index
    %7 = vector.load %arg6[%c0_5, %c0_6] : memref<1x512xf32, #tpu.memory_space<vmem>>, vector<1x512xf32>
    %8 = vector.shape_cast %7 : vector<1x512xf32> to vector<512xf32>
    %9 = vector.shape_cast %8 : vector<512xf32> to vector<1x512xf32>
    %10 = vector.broadcast %9 : vector<1x512xf32> to vector<8x512xf32>
    %11 = arith.addf %6, %10 : vector<8x512xf32>
    %cst_7 = arith.constant 0.353553385 : f32
    %12 = vector.broadcast %cst_7 : f32 to vector<8x512xf32>
    %13 = arith.mulf %11, %12 : vector<8x512xf32>
    %14 = vector.shape_cast %13 : vector<8x512xf32> to vector<8x4x128xf32>
    %15 = tpu.transpose %14, [1, 0, 2] : vector<8x4x128xf32> -> vector<4x8x128xf32>
    %c0_8 = arith.constant 0 : index
    %c0_9 = arith.constant 0 : index
    %c0_10 = arith.constant 0 : index
    %c0_11 = arith.constant 0 : index
    %16 = vector.load %arg4[%c0_8, %c0_9, %c0_10, %c0_11] : memref<1x1x8x8xbf16, #tpu.memory_space<vmem>>, vector<1x1x8x8xbf16>
    %17 = vector.shape_cast %16 : vector<1x1x8x8xbf16> to vector<8x8xbf16>
    %18 = arith.extf %17 : vector<8x8xbf16> to vector<8x8xf32>
    %cst_12 = arith.constant 0xFF800000 : f32
    %19 = vector.broadcast %cst_12 : f32 to vector<4x8x1xf32>
    %cst_13 = arith.constant 0.000000e+00 : f32
    %20 = vector.broadcast %cst_13 : f32 to vector<4x8x1xf32>
    %cst_14 = arith.constant 0.000000e+00 : f32
    %21 = vector.broadcast %cst_14 : f32 to vector<4x8x128xf32>
    %c0_15 = arith.constant 0 : index
    %c0_16 = arith.constant 0 : index
    %c0_17 = arith.constant 0 : index
    %22 = vector.load %arg18[%c0_15, %c0_16, %c0_17] : memref<4x8x128xf32, #tpu.memory_space<vmem>>, vector<4x8x128xf32>
    %c0_18 = arith.constant 0 : index
    %c0_19 = arith.constant 0 : index
    %c0_20 = arith.constant 0 : index
    %23 = vector.load %arg19[%c0_18, %c0_19, %c0_20] : memref<4x8x128xf32, #tpu.memory_space<vmem>>, vector<4x8x128xf32>
    "tpu.trace_start"() <{level = 10 : i32, message = "hqd,hkd->hqk"}> : () -> ()
    %cst_21 = arith.constant dense<0.000000e+00> : vector<4x8x8xf32>
    %24 = tpu.matmul %15, %22, %cst_21 {dimension_numbers = #tpu.dot_dimension_numbers<[2], [2], [1], [1], [0, 0, 0, 1, 1, 1], [0], [0]>} : vector<4x8x128xf32>, vector<4x8x128xf32>, vector<4x8x8xf32> -> vector<4x8x8xf32>
    "tpu.trace_stop"() : () -> ()
    %25 = vector.shape_cast %18 : vector<8x8xf32> to vector<1x8x8xf32>
    %26 = vector.broadcast %25 : vector<1x8x8xf32> to vector<4x8x8xf32>
    %27 = arith.addf %24, %26 : vector<4x8x8xf32>
    %cst_22 = arith.constant dense<0xFF800000> : vector<4x8xf32>
    %28 = vector.multi_reduction <maximumf>, %27, %cst_22 [2] : vector<4x8x8xf32> to vector<4x8xf32>
    %29 = vector.shape_cast %28 : vector<4x8xf32> to vector<4x8x1xf32>
    %30 = arith.maximumf %19, %29 : vector<4x8x1xf32>
    %31 = arith.subf %19, %30 : vector<4x8x1xf32>
    %32 = math.exp %31 : vector<4x8x1xf32>
    %33 = vector.broadcast %30 : vector<4x8x1xf32> to vector<4x8x8xf32>
    %34 = arith.subf %27, %33 : vector<4x8x8xf32>
    %35 = math.exp %34 : vector<4x8x8xf32>
    %36 = arith.mulf %32, %20 : vector<4x8x1xf32>
    %cst_23 = arith.constant dense<0.000000e+00> : vector<4x8xf32>
    %37 = vector.multi_reduction <add>, %35, %cst_23 [2] : vector<4x8x8xf32> to vector<4x8xf32>
    %38 = vector.shape_cast %37 : vector<4x8xf32> to vector<4x8x1xf32>
    %39 = arith.addf %36, %38 : vector<4x8x1xf32>
    %40 = vector.broadcast %32 : vector<4x8x1xf32> to vector<4x8x128xf32>
    %41 = arith.mulf %40, %21 : vector<4x8x128xf32>
    "tpu.trace_start"() <{level = 10 : i32, message = "hqk,hkd->hqd"}> : () -> ()
    %cst_24 = arith.constant dense<0.000000e+00> : vector<4x8x128xf32>
    %42 = tpu.matmul %35, %23, %cst_24 {dimension_numbers = #tpu.dot_dimension_numbers<[2], [1], [1], [2], [0, 0, 0, 1, 1, 2], [0], [0]>} : vector<4x8x8xf32>, vector<4x8x128xf32>, vector<4x8x128xf32> -> vector<4x8x128xf32>
    "tpu.trace_stop"() : () -> ()
    %43 = arith.addf %41, %42 : vector<4x8x128xf32>
    %44 = tpu.reciprocal %39 {approx = true} : vector<4x8x1xf32> -> vector<4x8x1xf32>
    %45 = arith.mulf %39, %44 : vector<4x8x1xf32>
    %cst_25 = arith.constant 2.000000e+00 : f32
    %46 = vector.broadcast %cst_25 : f32 to vector<4x8x1xf32>
    %47 = arith.subf %46, %45 : vector<4x8x1xf32>
    %48 = arith.mulf %44, %47 : vector<4x8x1xf32>
    %49 = vector.broadcast %48 : vector<4x8x1xf32> to vector<4x8x128xf32>
    %50 = arith.mulf %43, %49 : vector<4x8x128xf32>
    %51 = tpu.transpose %50, [1, 0, 2] : vector<4x8x128xf32> -> vector<8x4x128xf32>
    %52 = vector.shape_cast %51 : vector<8x4x128xf32> to vector<8x512xf32>
    %c0_26 = arith.constant 0 : index
    %c0_27 = arith.constant 0 : index
    %53 = vector.load %arg11[%c0_26, %c0_27] : memref<512x128xf32, #tpu.memory_space<vmem>>, vector<512x128xf32>
    %cst_28 = arith.constant dense<0.000000e+00> : vector<8x128xf32>
    %54 = tpu.matmul %52, %53, %cst_28 {dimension_numbers = #tpu.dot_dimension_numbers<[1], [0], [0], [1], [0, 0, 1, 1], [], []>} : vector<8x512xf32>, vector<512x128xf32>, vector<8x128xf32> -> vector<8x128xf32>
    %c0_29 = arith.constant 0 : index
    %c0_30 = arith.constant 0 : index
    %55 = vector.load %arg12[%c0_29, %c0_30] : memref<1x128xf32, #tpu.memory_space<vmem>>, vector<1x128xf32>
    %56 = vector.shape_cast %55 : vector<1x128xf32> to vector<128xf32>
    %57 = vector.shape_cast %56 : vector<128xf32> to vector<1x128xf32>
    %58 = vector.broadcast %57 : vector<1x128xf32> to vector<8x128xf32>
    %59 = arith.addf %54, %58 : vector<8x128xf32>
    %60 = arith.addf %59, %4 : vector<8x128xf32>
    %cst_31 = arith.constant dense<0.000000e+00> : vector<8xf32>
    %61 = vector.multi_reduction <add>, %60, %cst_31 [1] : vector<8x128xf32> to vector<8xf32>
    %62 = vector.shape_cast %61 : vector<8xf32> to vector<8x1xf32>
    %cst_32 = arith.constant 3.125000e-02 : f32
    %63 = vector.broadcast %cst_32 : f32 to vector<8x1xf32>
    %64 = arith.mulf %62, %63 : vector<8x1xf32>
    %65 = vector.broadcast %64 : vector<8x1xf32> to vector<8x128xf32>
    %66 = arith.subf %60, %65 : vector<8x128xf32>
    %67 = tpu.iota {dimensions = array<i32: 1>} : vector<1x128xi32>
    %c32_i32 = arith.constant 32 : i32
    %68 = vector.broadcast %c32_i32 : i32 to vector<1x128xi32>
    %69 = arith.cmpi slt, %67, %68 : vector<1x128xi32>
    %70 = arith.extui %69 : vector<1x128xi1> to vector<1x128xi32>
    %71 = arith.sitofp %70 : vector<1x128xi32> to vector<1x128xf32>
    %72 = vector.broadcast %71 : vector<1x128xf32> to vector<8x128xf32>
    %73 = arith.mulf %66, %72 : vector<8x128xf32>
    %74 = arith.mulf %73, %73 : vector<8x128xf32>
    %cst_33 = arith.constant dense<0.000000e+00> : vector<8xf32>
    %75 = vector.multi_reduction <add>, %74, %cst_33 [1] : vector<8x128xf32> to vector<8xf32>
    %76 = vector.shape_cast %75 : vector<8xf32> to vector<8x1xf32>
    %cst_34 = arith.constant 3.125000e-02 : f32
    %77 = vector.broadcast %cst_34 : f32 to vector<8x1xf32>
    %78 = arith.mulf %76, %77 : vector<8x1xf32>
    %cst_35 = arith.constant 9.99999996E-13 : f32
    %79 = vector.broadcast %cst_35 : f32 to vector<8x1xf32>
    %80 = arith.addf %78, %79 : vector<8x1xf32>
    %81 = math.rsqrt %80 : vector<8x1xf32>
    %82 = vector.broadcast %81 : vector<8x1xf32> to vector<8x128xf32>
    %83 = arith.mulf %73, %82 : vector<8x128xf32>
    %c0_36 = arith.constant 0 : index
    %c0_37 = arith.constant 0 : index
    %84 = vector.load %arg13[%c0_36, %c0_37] : memref<128x128xf32, #tpu.memory_space<vmem>>, vector<128x128xf32>
    %cst_38 = arith.constant dense<0.000000e+00> : vector<8x128xf32>
    %85 = tpu.matmul %83, %84, %cst_38 {dimension_numbers = #tpu.dot_dimension_numbers<[1], [0], [0], [1], [0, 0, 1, 1], [], []>} : vector<8x128xf32>, vector<128x128xf32>, vector<8x128xf32> -> vector<8x128xf32>
    %c0_39 = arith.constant 0 : index
    %c0_40 = arith.constant 0 : index
    %86 = vector.load %arg14[%c0_39, %c0_40] : memref<1x128xf32, #tpu.memory_space<vmem>>, vector<1x128xf32>
    %87 = vector.shape_cast %86 : vector<1x128xf32> to vector<128xf32>
    %88 = vector.shape_cast %87 : vector<128xf32> to vector<1x128xf32>
    %89 = vector.broadcast %88 : vector<1x128xf32> to vector<8x128xf32>
    %90 = arith.addf %85, %89 : vector<8x128xf32>
    %cst_41 = arith.constant 0.000000e+00 : f32
    %91 = vector.broadcast %cst_41 : f32 to vector<8x128xf32>
    %92 = arith.maximumf %90, %91 : vector<8x128xf32>
    %c0_42 = arith.constant 0 : index
    %c0_43 = arith.constant 0 : index
    %93 = vector.load %arg15[%c0_42, %c0_43] : memref<128x128xf32, #tpu.memory_space<vmem>>, vector<128x128xf32>
    %cst_44 = arith.constant dense<0.000000e+00> : vector<8x128xf32>
    %94 = tpu.matmul %92, %93, %cst_44 {dimension_numbers = #tpu.dot_dimension_numbers<[1], [0], [0], [1], [0, 0, 1, 1], [], []>} : vector<8x128xf32>, vector<128x128xf32>, vector<8x128xf32> -> vector<8x128xf32>
    %c0_45 = arith.constant 0 : index
    %c0_46 = arith.constant 0 : index
    %95 = vector.load %arg16[%c0_45, %c0_46] : memref<1x128xf32, #tpu.memory_space<vmem>>, vector<1x128xf32>
    %96 = vector.shape_cast %95 : vector<1x128xf32> to vector<128xf32>
    %97 = vector.shape_cast %96 : vector<128xf32> to vector<1x128xf32>
    %98 = vector.broadcast %97 : vector<1x128xf32> to vector<8x128xf32>
    %99 = arith.addf %94, %98 : vector<8x128xf32>
    %100 = arith.addf %99, %83 : vector<8x128xf32>
    %cst_47 = arith.constant dense<0.000000e+00> : vector<8xf32>
    %101 = vector.multi_reduction <add>, %100, %cst_47 [1] : vector<8x128xf32> to vector<8xf32>
    %102 = vector.shape_cast %101 : vector<8xf32> to vector<8x1xf32>
    %cst_48 = arith.constant 3.125000e-02 : f32
    %103 = vector.broadcast %cst_48 : f32 to vector<8x1xf32>
    %104 = arith.mulf %102, %103 : vector<8x1xf32>
    %105 = vector.broadcast %104 : vector<8x1xf32> to vector<8x128xf32>
    %106 = arith.subf %100, %105 : vector<8x128xf32>
    %107 = tpu.iota {dimensions = array<i32: 1>} : vector<1x128xi32>
    %c32_i32_49 = arith.constant 32 : i32
    %108 = vector.broadcast %c32_i32_49 : i32 to vector<1x128xi32>
    %109 = arith.cmpi slt, %107, %108 : vector<1x128xi32>
    %110 = arith.extui %109 : vector<1x128xi1> to vector<1x128xi32>
    %111 = arith.sitofp %110 : vector<1x128xi32> to vector<1x128xf32>
    %112 = vector.broadcast %111 : vector<1x128xf32> to vector<8x128xf32>
    %113 = arith.mulf %106, %112 : vector<8x128xf32>
    %114 = arith.mulf %113, %113 : vector<8x128xf32>
    %cst_50 = arith.constant dense<0.000000e+00> : vector<8xf32>
    %115 = vector.multi_reduction <add>, %114, %cst_50 [1] : vector<8x128xf32> to vector<8xf32>
    %116 = vector.shape_cast %115 : vector<8xf32> to vector<8x1xf32>
    %cst_51 = arith.constant 3.125000e-02 : f32
    %117 = vector.broadcast %cst_51 : f32 to vector<8x1xf32>
    %118 = arith.mulf %116, %117 : vector<8x1xf32>
    %cst_52 = arith.constant 9.99999996E-13 : f32
    %119 = vector.broadcast %cst_52 : f32 to vector<8x1xf32>
    %120 = arith.addf %118, %119 : vector<8x1xf32>
    %121 = math.rsqrt %120 : vector<8x1xf32>
    %122 = vector.broadcast %121 : vector<8x1xf32> to vector<8x128xf32>
    %123 = arith.mulf %113, %122 : vector<8x128xf32>
    %c0_53 = arith.constant 0 : index
    %c0_54 = arith.constant 0 : index
    %c0_55 = arith.constant 0 : index
    %124 = vector.load %arg17[%c0_53, %c0_54, %c0_55] : memref<1x8x128xf32, #tpu.memory_space<vmem>>, vector<1x8x128xf32>
    %125 = vector.shape_cast %124 : vector<1x8x128xf32> to vector<8x128xf32>
    %126 = vector.shape_cast %123 : vector<8x128xf32> to vector<1x8x128xf32>
    tpu.vector_store %arg17[%c0_53, %c0_54, %c0_55], %126 {strides = array<i32>} : memref<1x8x128xf32, #tpu.memory_space<vmem>>, vector<1x8x128xf32>,
    return
  }
  func.func @transform_0(%arg0: i32, %arg1: i32) -> (i32, i32, i32) {
    %c0_i32 = arith.constant 0 : i32
    %c0_i32_0 = arith.constant 0 : i32
    return %arg0, %arg1, %c0_i32 : i32, i32, i32
  }
  func.func @transform_1(%arg0: i32, %arg1: i32) -> (i32, i32, i32) {
    %c0_i32 = arith.constant 0 : i32
    %c0_i32_0 = arith.constant 0 : i32
    %c0_i32_1 = arith.constant 0 : i32
    return %arg0, %c0_i32, %c0_i32_0 : i32, i32, i32
  }
  func.func @transform_2(%arg0: i32, %arg1: i32) -> (i32, i32, i32, i32) {
    %c0_i32 = arith.constant 0 : i32
    %c0_i32_0 = arith.constant 0 : i32
    %c0_i32_1 = arith.constant 0 : i32
    return %arg0, %c0_i32, %arg1, %c0_i32_0 : i32, i32, i32, i32
  }
  func.func @transform_3(%arg0: i32, %arg1: i32) -> (i32, i32) {
    %c0_i32 = arith.constant 0 : i32
    %c0_i32_0 = arith.constant 0 : i32
    %c0_i32_1 = arith.constant 0 : i32
    return %c0_i32, %c0_i32_0 : i32, i32
  }
  func.func @transform_4(%arg0: i32, %arg1: i32) -> (i32, i32) {
    %c0_i32 = arith.constant 0 : i32
    %c0_i32_0 = arith.constant 0 : i32
    %c0_i32_1 = arith.constant 0 : i32
    return %c0_i32, %c0_i32_0 : i32, i32
  }
  func.func @transform_5(%arg0: i32, %arg1: i32) -> (i32, i32) {
    %c0_i32 = arith.constant 0 : i32
    %c0_i32_0 = arith.constant 0 : i32
    %c0_i32_1 = arith.constant 0 : i32
    return %c0_i32, %c0_i32_0 : i32, i32
  }
  func.func @transform_6(%arg0: i32, %arg1: i32) -> (i32, i32) {
    %c0_i32 = arith.constant 0 : i32
    %c0_i32_0 = arith.constant 0 : i32
    %c0_i32_1 = arith.constant 0 : i32
    return %c0_i32, %c0_i32_0 : i32, i32
  }
  func.func @transform_7(%arg0: i32, %arg1: i32) -> (i32, i32) {
    %c0_i32 = arith.constant 0 : i32
    %c0_i32_0 = arith.constant 0 : i32
    %c0_i32_1 = arith.constant 0 : i32
    return %c0_i32, %c0_i32_0 : i32, i32
  }
  func.func @transform_8(%arg0: i32, %arg1: i32) -> (i32, i32) {
    %c0_i32 = arith.constant 0 : i32
    %c0_i32_0 = arith.constant 0 : i32
    %c0_i32_1 = arith.constant 0 : i32
    return %c0_i32, %c0_i32_0 : i32, i32
  }
  func.func @transform_9(%arg0: i32, %arg1: i32) -> (i32, i32) {
    %c0_i32 = arith.constant 0 : i32
    %c0_i32_0 = arith.constant 0 : i32
    %c0_i32_1 = arith.constant 0 : i32
    return %c0_i32, %c0_i32_0 : i32, i32
  }
  func.func @transform_10(%arg0: i32, %arg1: i32) -> (i32, i32) {
    %c0_i32 = arith.constant 0 : i32
    %c0_i32_0 = arith.constant 0 : i32
    %c0_i32_1 = arith.constant 0 : i32
    return %c0_i32, %c0_i32_0 : i32, i32
  }
  func.func @transform_11(%arg0: i32, %arg1: i32) -> (i32, i32) {
    %c0_i32 = arith.constant 0 : i32
    %c0_i32_0 = arith.constant 0 : i32
    %c0_i32_1 = arith.constant 0 : i32
    return %c0_i32, %c0_i32_0 : i32, i32
  }
  func.func @transform_12(%arg0: i32, %arg1: i32) -> (i32, i32) {
    %c0_i32 = arith.constant 0 : i32
    %c0_i32_0 = arith.constant 0 : i32
    %c0_i32_1 = arith.constant 0 : i32
    return %c0_i32, %c0_i32_0 : i32, i32
  }
  func.func @transform_13(%arg0: i32, %arg1: i32) -> (i32, i32) {
    %c0_i32 = arith.constant 0 : i32
    %c0_i32_0 = arith.constant 0 : i32
    %c0_i32_1 = arith.constant 0 : i32
    return %c0_i32, %c0_i32_0 : i32, i32
  }
  func.func @transform_14(%arg0: i32, %arg1: i32) -> (i32, i32) {
    %c0_i32 = arith.constant 0 : i32
    %c0_i32_0 = arith.constant 0 : i32
    %c0_i32_1 = arith.constant 0 : i32
    return %c0_i32, %c0_i32_0 : i32, i32
  }
  func.func @transform_15(%arg0: i32, %arg1: i32) -> (i32, i32, i32) {
    %c0_i32 = arith.constant 0 : i32
    %c0_i32_0 = arith.constant 0 : i32
    return %arg0, %arg1, %c0_i32 : i32, i32, i32
  }
}

</mosaic_0001>

<llo_original>
// kernel: tpu_custom_call.1
$region0: #{tpu_custom_call.1}
  #allocation0 [shape = 'u32[]', space=smem, size = 0x4, offset = 0x4, fixed_abs, tag = 'smem constant byte address 0x4 - core index']
  #allocation1 [shape = 'u32[72,128]{1,0:T(1,128)}', space=vmem, size = 0x9000, scoped, tag = 'internal scratch']
  #allocation2 [shape = 'f32[4,8,128]{2,1,0:T(8,128)}', space=vmem, size = 0x4000, scoped, tag = 'scratch operand']
  #allocation3 [shape = 'f32[4,8,128]{2,1,0:T(8,128)}', space=vmem, size = 0x4000, scoped, tag = 'scratch operand']
  %s0 = inlined_call_operand.hbm [shape: f32[2,8,128], index: 0, kind: input, shape index: {}]
  %s1 = inlined_call_operand.hbm [shape: f32[2,8,128], index: 1, kind: input, shape index: {}]
  %s2 = inlined_call_operand.hbm [shape: bf16[2,1,8,8], index: 2, kind: input, shape index: {}]
  %s3 = inlined_call_operand.hbm [shape: f32[128,512], index: 3, kind: input, shape index: {}]
  %s4 = inlined_call_operand.hbm [shape: f32[1,512], index: 4, kind: input, shape index: {}]
  %s5 = inlined_call_operand.hbm [shape: f32[128,512], index: 5, kind: input, shape index: {}]
  %s6 = inlined_call_operand.vmem [shape: f32[1,512], index: 6, kind: input, shape index: {}]
  %s7 = inlined_call_operand.hbm [shape: f32[128,512], index: 7, kind: input, shape index: {}]
  %s8 = inlined_call_operand.hbm [shape: f32[1,512], index: 8, kind: input, shape index: {}]
  %s9 = inlined_call_operand.hbm [shape: f32[512,128], index: 9, kind: input, shape index: {}]
  %s10 = inlined_call_operand.vmem [shape: f32[1,128], index: 10, kind: input, shape index: {}]
  %s11 = inlined_call_operand.hbm [shape: f32[128,128], index: 11, kind: input, shape index: {}]
  %s12 = inlined_call_operand.vmem [shape: f32[1,128], index: 12, kind: input, shape index: {}]
  %s13 = inlined_call_operand.hbm [shape: f32[128,128], index: 13, kind: input, shape index: {}]
  %s14 = inlined_call_operand.vmem [shape: f32[1,128], index: 14, kind: input, shape index: {}]
  %s15 = inlined_call_operand.hbm [shape: f32[2,8,128], index: 15, kind: output, shape index: {}]
  %s16 = sld [smem:[#allocation0]]
  $region141: #{tpu_custom_call.1} parent=0
    _
  %s18 = ssub.s32 1, %s16
  %s19 = scalar_select 0, %s18, %s16
  $region1: #{tpu_custom_call.1} parent=0
    #allocation4 [shape = 'u8[8192]{0}', space=vmem, size = 0x2000, scoped, tag = 'input window, operand 0']
    #allocation5 [shape = 's32[2]{0}', space=sflag, size = 0x8, scoped, tag = 'scoped memory for tpu_custom_call.1']
    #allocation6 [shape = 's32[2]{0}', space=sflag, size = 0x8, scoped, tag = 'scoped memory for tpu_custom_call.1']
    #allocation7 [shape = 'u8[8192]{0}', space=vmem, size = 0x2000, scoped, tag = 'input window, operand 1']
    #allocation8 [shape = 's32[2]{0}', space=sflag, size = 0x8, scoped, tag = 'scoped memory for tpu_custom_call.1']
    #allocation9 [shape = 'u8[4096]{0}', space=vmem, size = 0x1000, scoped, tag = 'input window, operand 2']
    #allocation10 [shape = 'u8[262144]{0}', space=vmem, size = 0x40000, scoped, tag = 'input window, operand 3, single buffered']
    #allocation11 [shape = 's32[1]{0}', space=sflag, size = 0x4, scoped, tag = 'scoped memory for tpu_custom_call.1']
    #allocation12 [shape = 'u8[2048]{0}', space=vmem, size = 0x800, scoped, tag = 'input window, operand 4, single buffered']
    #allocation13 [shape = 'u8[262144]{0}', space=vmem, size = 0x40000, scoped, tag = 'input window, operand 5, single buffered']
    #allocation14 [shape = 's32[1]{0}', space=sflag, size = 0x4, scoped, tag = 'scoped memory for tpu_custom_call.1']
    #allocation15 [shape = 'u8[262144]{0}', space=vmem, size = 0x40000, scoped, tag = 'input window, operand 7, single buffered']
    #allocation16 [shape = 'u8[2048]{0}', space=vmem, size = 0x800, scoped, tag = 'input window, operand 8, single buffered']
    #allocation17 [shape = 's32[1]{0}', space=sflag, size = 0x4, scoped, tag = 'scoped memory for tpu_custom_call.1']
    #allocation18 [shape = 'u8[262144]{0}', space=vmem, size = 0x40000, scoped, tag = 'input window, operand 9, single buffered']
    #allocation19 [shape = 'u8[65536]{0}', space=vmem, size = 0x10000, scoped, tag = 'input window, operand 11, single buffered']
    #allocation20 [shape = 's32[1]{0}', space=sflag, size = 0x4, scoped, tag = 'scoped memory for tpu_custom_call.1']
    #allocation21 [shape = 'u8[65536]{0}', space=vmem, size = 0x10000, scoped, tag = 'input window, operand 13, single buffered']
    #allocation22 [shape = 'u8[8192]{0}', space=vmem, size = 0x2000, scoped, tag = 'output window, operand 0']
    %20 = vsyncpa [#allocation5], 0
    %s21 = scalar_lea.sflag [#allocation5], 1
    %22 = vsyncpa %s21, 0
    %23 = vsyncpa [#allocation8], 0
    %s24 = scalar_lea.sflag [#allocation8], 1
    %25 = vsyncpa %s24, 0
    %26 = vsyncpa [#allocation11], 0
    %27 = vsyncpa [#allocation14], 0
    %28 = vsyncpa [#allocation17], 0
    %29 = vsyncpa [#allocation20], 0
    %30 = vsyncpa [#allocation6], 0
    %s31 = scalar_lea.sflag [#allocation6], 1
    %32 = vsyncpa %s31, 0
    loop: start=0, step=1, limit=4
    $region2: #{tpu_custom_call.1} parent=1 // loop_pre_header
      _
    $region3: #{tpu_custom_call.1} parent=1 // loop_header
      %s34 = sphi 0, %s38
      %p35 = scmp.ge.s32.totalorder %s34, 4
      %s41 = sphi 0, %s53
      %s42 = sphi 0, %s49
      %s43 = sphi 0, %s41
      %s44 = sphi 0, %s42
      %s45 = sphi 0, %s43
      %s46 = sphi 0, %s44
      %s58 = sphi 0, %s60
      %s61 = sphi 0, %s58
      %s62 = sphi 0, %s61
      %s78 = sphi 0, %s62
      %s84 = sphi 0, %s86
      %s87 = sphi 0, %s84
      %s88 = sphi 0, %s87
      %s104 = sphi 0, %s88
      %s112 = sphi 0, %s114
      %s115 = sphi 0, %s112
      %s116 = sphi 0, %s115
      %s132 = sphi 0, %s116
      %s136 = sphi 0, %s136
      %s138 = sphi 0, %s136
      %s139 = sphi 0, %s138
      %s153 = sphi 0, %s139
      %s157 = sphi 0, %s157
      %s159 = sphi 0, %s157
      %s160 = sphi 0, %s159
      %s174 = sphi 0, %s160
      %s178 = sphi 0, %s178
      %s180 = sphi 0, %s178
      %s181 = sphi 0, %s180
      %s195 = sphi 0, %s181
      %s199 = sphi 0, %s199
      %s201 = sphi 0, %s199
      %s202 = sphi 0, %s201
      %s216 = sphi 0, %s202
      %s220 = sphi 0, %s220
      %s222 = sphi 0, %s220
      %s223 = sphi 0, %s222
      %s237 = sphi 0, %s223
      %s241 = sphi 0, %s241
      %s243 = sphi 0, %s241
      %s244 = sphi 0, %s243
      %s258 = sphi 0, %s244
      %s262 = sphi 0, %s262
      %s264 = sphi 0, %s262
      %s265 = sphi 0, %s264
      %s279 = sphi 0, %s265
      %s283 = sphi 0, %s283
      %s285 = sphi 0, %s283
      %s286 = sphi 0, %s285
      %s300 = sphi 0, %s286
      %s304 = sphi 0, %s304
      %s306 = sphi 0, %s304
      %s307 = sphi 0, %s306
      %s321 = sphi 0, %s307
      %s325 = sphi 0, %s325
      %s327 = sphi 0, %s325
      %s328 = sphi 0, %s327
      %s342 = sphi 0, %s328
      %s346 = sphi 0, %s346
      %s348 = sphi 0, %s346
      %s349 = sphi 0, %s348
      %s363 = sphi 0, %s349
      %s367 = sphi 0, %s367
      %s369 = sphi 0, %s367
      %s370 = sphi 0, %s369
      %s384 = sphi 0, %s370
      %s392 = sphi 0, %s394
      %s395 = sphi 0, %s392
      %s396 = sphi 0, %s395
      %s412 = sphi 0, %s396
    $region4: #{tpu_custom_call.1} parent=1 // loop_header_branch
      %37 = sbr.rel (%p35) target = $region8
    $region5: #{tpu_custom_call.1} parent=1 // loop_body
      %s39 = ssub.s32 %s34, 1
      %s40 = ssub.s32 %s34, 2
      %s47 = sadd.s32 1, %s42
      %p48 = scmp.ge.s32.totalorder %s47, 1
      %s49 = scalar_select %p48, 0, %s47
      %s50 = sadd.s32 1, %s41
      %s51 = scalar_select %p48, %s50, %s41
      %p52 = scmp.ge.s32.totalorder %s51, 2
      %s53 = scalar_select %p52, 0, %s51
      %s54 = ssub.s32 %s41, %s53
      %s55 = ssub.s32 %s42, %s49
      %s56 = sor.u32 %s54, %s55
      %p57 = scmp.eq.s32.totalorder %s56, 0
      %s59 = sadd.s32 %s58, 1
      %s60 = scalar_select %p57, %s58, %s59
      %p63 = pneg %p57
      %p64 = scmp.eq.s32.totalorder %s34, 1
      %p65 = por %p63, %p64
      %p66 = scmp.ne.s32.totalorder %s58, %s61
      %p67 = scmp.eq.s32.totalorder %s34, 0
      %p68 = por %p66, %p67
      %p69 = scmp.ne.s32.totalorder %s58, %s61
      %p70 = scmp.eq.s32.totalorder %s39, 1
      %p71 = por %p69, %p70
      %p72 = scmp.ne.s32.totalorder %s61, %s62
      %p73 = scmp.eq.s32.totalorder %s39, 0
      %p74 = por %p72, %p73
      %p75 = scmp.ne.s32.totalorder %s61, %s62
      %p76 = scmp.eq.s32.totalorder %s40, 1
      %p77 = por %p75, %p76
      %p79 = scmp.ne.s32.totalorder %s62, %s78
      %p80 = scmp.eq.s32.totalorder %s40, 0
      %p81 = por %p79, %p80
      %s82 = ssub.s32 %s41, %s53
      %p83 = scmp.eq.s32.totalorder %s82, 0
      %s85 = sadd.s32 %s84, 1
      %s86 = scalar_select %p83, %s84, %s85
      %p89 = pneg %p83
      %p90 = scmp.eq.s32.totalorder %s34, 1
      %p91 = por %p89, %p90
      %p92 = scmp.ne.s32.totalorder %s84, %s87
      %p93 = scmp.eq.s32.totalorder %s34, 0
      %p94 = por %p92, %p93
      %p95 = scmp.ne.s32.totalorder %s84, %s87
      %p96 = scmp.eq.s32.totalorder %s39, 1
      %p97 = por %p95, %p96
      %p98 = scmp.ne.s32.totalorder %s87, %s88
      %p99 = scmp.eq.s32.totalorder %s39, 0
      %p100 = por %p98, %p99
      %p101 = scmp.ne.s32.totalorder %s87, %s88
      %p102 = scmp.eq.s32.totalorder %s40, 1
      %p103 = por %p101, %p102
      %p105 = scmp.ne.s32.totalorder %s88, %s104
      %p106 = scmp.eq.s32.totalorder %s40, 0
      %p107 = por %p105, %p106
      %s108 = ssub.s32 %s41, %s53
      %s109 = ssub.s32 %s42, %s49
      %s110 = sor.u32 %s108, %s109
      %p111 = scmp.eq.s32.totalorder %s110, 0
      %s113 = sadd.s32 %s112, 1
      %s114 = scalar_select %p111, %s112, %s113
      %p117 = pneg %p111
      %p118 = scmp.eq.s32.totalorder %s34, 1
      %p119 = por %p117, %p118
      %p120 = scmp.ne.s32.totalorder %s112, %s115
      %p121 = scmp.eq.s32.totalorder %s34, 0
      %p122 = por %p120, %p121
      %p123 = scmp.ne.s32.totalorder %s112, %s115
      %p124 = scmp.eq.s32.totalorder %s39, 1
      %p125 = por %p123, %p124
      %p126 = scmp.ne.s32.totalorder %s115, %s116
      %p127 = scmp.eq.s32.totalorder %s39, 0
      %p128 = por %p126, %p127
      %p129 = scmp.ne.s32.totalorder %s115, %s116
      %p130 = scmp.eq.s32.totalorder %s40, 1
      %p131 = por %p129, %p130
      %p133 = scmp.ne.s32.totalorder %s116, %s132
      %p134 = scmp.eq.s32.totalorder %s40, 0
      %p135 = por %p133, %p134
      %s137 = sadd.s32 %s136, 1
      %p140 = scmp.eq.s32.totalorder %s34, 1
      %p141 = scmp.ne.s32.totalorder %s136, %s138
      %p142 = scmp.eq.s32.totalorder %s34, 0
      %p143 = por %p141, %p142
      %p144 = scmp.ne.s32.totalorder %s136, %s138
      %p145 = scmp.eq.s32.totalorder %s39, 1
      %p146 = por %p144, %p145
      %p147 = scmp.ne.s32.totalorder %s138, %s139
      %p148 = scmp.eq.s32.totalorder %s39, 0
      %p149 = por %p147, %p148
      %p150 = scmp.ne.s32.totalorder %s138, %s139
      %p151 = scmp.eq.s32.totalorder %s40, 1
      %p152 = por %p150, %p151
      %p154 = scmp.ne.s32.totalorder %s139, %s153
      %p155 = scmp.eq.s32.totalorder %s40, 0
      %p156 = por %p154, %p155
      %s158 = sadd.s32 %s157, 1
      %p161 = scmp.eq.s32.totalorder %s34, 1
      %p162 = scmp.ne.s32.totalorder %s157, %s159
      %p163 = scmp.eq.s32.totalorder %s34, 0
      %p164 = por %p162, %p163
      %p165 = scmp.ne.s32.totalorder %s157, %s159
      %p166 = scmp.eq.s32.totalorder %s39, 1
      %p167 = por %p165, %p166
      %p168 = scmp.ne.s32.totalorder %s159, %s160
      %p169 = scmp.eq.s32.totalorder %s39, 0
      %p170 = por %p168, %p169
      %p171 = scmp.ne.s32.totalorder %s159, %s160
      %p172 = scmp.eq.s32.totalorder %s40, 1
      %p173 = por %p171, %p172
      %p175 = scmp.ne.s32.totalorder %s160, %s174
      %p176 = scmp.eq.s32.totalorder %s40, 0
      %p177 = por %p175, %p176
      %s179 = sadd.s32 %s178, 1
      %p182 = scmp.eq.s32.totalorder %s34, 1
      %p183 = scmp.ne.s32.totalorder %s178, %s180
      %p184 = scmp.eq.s32.totalorder %s34, 0
      %p185 = por %p183, %p184
      %p186 = scmp.ne.s32.totalorder %s178, %s180
      %p187 = scmp.eq.s32.totalorder %s39, 1
      %p188 = por %p186, %p187
      %p189 = scmp.ne.s32.totalorder %s180, %s181
      %p190 = scmp.eq.s32.totalorder %s39, 0
      %p191 = por %p189, %p190
      %p192 = scmp.ne.s32.totalorder %s180, %s181
      %p193 = scmp.eq.s32.totalorder %s40, 1
      %p194 = por %p192, %p193
      %p196 = scmp.ne.s32.totalorder %s181, %s195
      %p197 = scmp.eq.s32.totalorder %s40, 0
      %p198 = por %p196, %p197
      %s200 = sadd.s32 %s199, 1
      %p203 = scmp.eq.s32.totalorder %s34, 1
      %p204 = scmp.ne.s32.totalorder %s199, %s201
      %p205 = scmp.eq.s32.totalorder %s34, 0
      %p206 = por %p204, %p205
      %p207 = scmp.ne.s32.totalorder %s199, %s201
      %p208 = scmp.eq.s32.totalorder %s39, 1
      %p209 = por %p207, %p208
      %p210 = scmp.ne.s32.totalorder %s201, %s202
      %p211 = scmp.eq.s32.totalorder %s39, 0
      %p212 = por %p210, %p211
      %p213 = scmp.ne.s32.totalorder %s201, %s202
      %p214 = scmp.eq.s32.totalorder %s40, 1
      %p215 = por %p213, %p214
      %p217 = scmp.ne.s32.totalorder %s202, %s216
      %p218 = scmp.eq.s32.totalorder %s40, 0
      %p219 = por %p217, %p218
      %s221 = sadd.s32 %s220, 1
      %p224 = scmp.eq.s32.totalorder %s34, 1
      %p225 = scmp.ne.s32.totalorder %s220, %s222
      %p226 = scmp.eq.s32.totalorder %s34, 0
      %p227 = por %p225, %p226
      %p228 = scmp.ne.s32.totalorder %s220, %s222
      %p229 = scmp.eq.s32.totalorder %s39, 1
      %p230 = por %p228, %p229
      %p231 = scmp.ne.s32.totalorder %s222, %s223
      %p232 = scmp.eq.s32.totalorder %s39, 0
      %p233 = por %p231, %p232
      %p234 = scmp.ne.s32.totalorder %s222, %s223
      %p235 = scmp.eq.s32.totalorder %s40, 1
      %p236 = por %p234, %p235
      %p238 = scmp.ne.s32.totalorder %s223, %s237
      %p239 = scmp.eq.s32.totalorder %s40, 0
      %p240 = por %p238, %p239
      %s242 = sadd.s32 %s241, 1
      %p245 = scmp.eq.s32.totalorder %s34, 1
      %p246 = scmp.ne.s32.totalorder %s241, %s243
      %p247 = scmp.eq.s32.totalorder %s34, 0
      %p248 = por %p246, %p247
      %p249 = scmp.ne.s32.totalorder %s241, %s243
      %p250 = scmp.eq.s32.totalorder %s39, 1
      %p251 = por %p249, %p250
      %p252 = scmp.ne.s32.totalorder %s243, %s244
      %p253 = scmp.eq.s32.totalorder %s39, 0
      %p254 = por %p252, %p253
      %p255 = scmp.ne.s32.totalorder %s243, %s244
      %p256 = scmp.eq.s32.totalorder %s40, 1
      %p257 = por %p255, %p256
      %p259 = scmp.ne.s32.totalorder %s244, %s258
      %p260 = scmp.eq.s32.totalorder %s40, 0
      %p261 = por %p259, %p260
      %s263 = sadd.s32 %s262, 1
      %p266 = scmp.eq.s32.totalorder %s34, 1
      %p267 = scmp.ne.s32.totalorder %s262, %s264
      %p268 = scmp.eq.s32.totalorder %s34, 0
      %p269 = por %p267, %p268
      %p270 = scmp.ne.s32.totalorder %s262, %s264
      %p271 = scmp.eq.s32.totalorder %s39, 1
      %p272 = por %p270, %p271
      %p273 = scmp.ne.s32.totalorder %s264, %s265
      %p274 = scmp.eq.s32.totalorder %s39, 0
      %p275 = por %p273, %p274
      %p276 = scmp.ne.s32.totalorder %s264, %s265
      %p277 = scmp.eq.s32.totalorder %s40, 1
      %p278 = por %p276, %p277
      %p280 = scmp.ne.s32.totalorder %s265, %s279
      %p281 = scmp.eq.s32.totalorder %s40, 0
      %p282 = por %p280, %p281
      %s284 = sadd.s32 %s283, 1
      %p287 = scmp.eq.s32.totalorder %s34, 1
      %p288 = scmp.ne.s32.totalorder %s283, %s285
      %p289 = scmp.eq.s32.totalorder %s34, 0
      %p290 = por %p288, %p289
      %p291 = scmp.ne.s32.totalorder %s283, %s285
      %p292 = scmp.eq.s32.totalorder %s39, 1
      %p293 = por %p291, %p292
      %p294 = scmp.ne.s32.totalorder %s285, %s286
      %p295 = scmp.eq.s32.totalorder %s39, 0
      %p296 = por %p294, %p295
      %p297 = scmp.ne.s32.totalorder %s285, %s286
      %p298 = scmp.eq.s32.totalorder %s40, 1
      %p299 = por %p297, %p298
      %p301 = scmp.ne.s32.totalorder %s286, %s300
      %p302 = scmp.eq.s32.totalorder %s40, 0
      %p303 = por %p301, %p302
      %s305 = sadd.s32 %s304, 1
      %p308 = scmp.eq.s32.totalorder %s34, 1
      %p309 = scmp.ne.s32.totalorder %s304, %s306
      %p310 = scmp.eq.s32.totalorder %s34, 0
      %p311 = por %p309, %p310
      %p312 = scmp.ne.s32.totalorder %s304, %s306
      %p313 = scmp.eq.s32.totalorder %s39, 1
      %p314 = por %p312, %p313
      %p315 = scmp.ne.s32.totalorder %s306, %s307
      %p316 = scmp.eq.s32.totalorder %s39, 0
      %p317 = por %p315, %p316
      %p318 = scmp.ne.s32.totalorder %s306, %s307
      %p319 = scmp.eq.s32.totalorder %s40, 1
      %p320 = por %p318, %p319
      %p322 = scmp.ne.s32.totalorder %s307, %s321
      %p323 = scmp.eq.s32.totalorder %s40, 0
      %p324 = por %p322, %p323
      %s326 = sadd.s32 %s325, 1
      %p329 = scmp.eq.s32.totalorder %s34, 1
      %p330 = scmp.ne.s32.totalorder %s325, %s327
      %p331 = scmp.eq.s32.totalorder %s34, 0
      %p332 = por %p330, %p331
      %p333 = scmp.ne.s32.totalorder %s325, %s327
      %p334 = scmp.eq.s32.totalorder %s39, 1
      %p335 = por %p333, %p334
      %p336 = scmp.ne.s32.totalorder %s327, %s328
      %p337 = scmp.eq.s32.totalorder %s39, 0
      %p338 = por %p336, %p337
      %p339 = scmp.ne.s32.totalorder %s327, %s328
      %p340 = scmp.eq.s32.totalorder %s40, 1
      %p341 = por %p339, %p340
      %p343 = scmp.ne.s32.totalorder %s328, %s342
      %p344 = scmp.eq.s32.totalorder %s40, 0
      %p345 = por %p343, %p344
      %s347 = sadd.s32 %s346, 1
      %p350 = scmp.eq.s32.totalorder %s34, 1
      %p351 = scmp.ne.s32.totalorder %s346, %s348
      %p352 = scmp.eq.s32.totalorder %s34, 0
      %p353 = por %p351, %p352
      %p354 = scmp.ne.s32.totalorder %s346, %s348
      %p355 = scmp.eq.s32.totalorder %s39, 1
      %p356 = por %p354, %p355
      %p357 = scmp.ne.s32.totalorder %s348, %s349
      %p358 = scmp.eq.s32.totalorder %s39, 0
      %p359 = por %p357, %p358
      %p360 = scmp.ne.s32.totalorder %s348, %s349
      %p361 = scmp.eq.s32.totalorder %s40, 1
      %p362 = por %p360, %p361
      %p364 = scmp.ne.s32.totalorder %s349, %s363
      %p365 = scmp.eq.s32.totalorder %s40, 0
      %p366 = por %p364, %p365
      %s368 = sadd.s32 %s367, 1
      %p371 = scmp.eq.s32.totalorder %s34, 1
      %p372 = scmp.ne.s32.totalorder %s367, %s369
      %p373 = scmp.eq.s32.totalorder %s34, 0
      %p374 = por %p372, %p373
      %p375 = scmp.ne.s32.totalorder %s367, %s369
      %p376 = scmp.eq.s32.totalorder %s39, 1
      %p377 = por %p375, %p376
      %p378 = scmp.ne.s32.totalorder %s369, %s370
      %p379 = scmp.eq.s32.totalorder %s39, 0
      %p380 = por %p378, %p379
      %p381 = scmp.ne.s32.totalorder %s369, %s370
      %p382 = scmp.eq.s32.totalorder %s40, 1
      %p383 = por %p381, %p382
      %p385 = scmp.ne.s32.totalorder %s370, %s384
      %p386 = scmp.eq.s32.totalorder %s40, 0
      %p387 = por %p385, %p386
      %s388 = ssub.s32 %s41, %s53
      %s389 = ssub.s32 %s42, %s49
      %s390 = sor.u32 %s388, %s389
      %p391 = scmp.eq.s32.totalorder %s390, 0
      %s393 = sadd.s32 %s392, 1
      %s394 = scalar_select %p391, %s392, %s393
      %p397 = pneg %p391
      %p398 = scmp.eq.s32.totalorder %s34, 1
      %p399 = por %p397, %p398
      %p400 = scmp.ne.s32.totalorder %s392, %s395
      %p401 = scmp.eq.s32.totalorder %s34, 0
      %p402 = por %p400, %p401
      %p403 = scmp.ne.s32.totalorder %s392, %s395
      %p404 = scmp.eq.s32.totalorder %s39, 1
      %p405 = por %p403, %p404
      %p406 = scmp.ne.s32.totalorder %s395, %s396
      %p407 = scmp.eq.s32.totalorder %s39, 0
      %p408 = por %p406, %p407
      %p409 = scmp.ne.s32.totalorder %s395, %s396
      %p410 = scmp.eq.s32.totalorder %s40, 1
      %p411 = por %p409, %p410
      %p413 = scmp.ne.s32.totalorder %s396, %s412
      %p414 = scmp.eq.s32.totalorder %s40, 0
      %p415 = por %p413, %p414
      %p416 = scmp.le.s32.totalorder 1, %s34
      %p417 = scmp.lt.s32.totalorder %s34, 3
      %p418 = pnand %p416, %p417
      %p419 = pneg %p418
      // Predicated region
      $region9: #{tpu_custom_call.1} parent=5 // pred_check
        _
      $region10: #{tpu_custom_call.1} parent=5 // pred_check_branch
        %421 = sbr.rel (%p418) target = $region12
      $region11: #{tpu_custom_call.1} parent=5 // pred_region
        %s422 = ssub.s32 %s34, 1
        // Predicated region
        $region13: #{tpu_custom_call.1} parent=11 // pred_check
          %p423 = pneg %p149
        $region14: #{tpu_custom_call.1} parent=11 // pred_check_branch
          %425 = sbr.rel (%p423) target = $region16
        $region15: #{tpu_custom_call.1} parent=11 // pred_region
          %427 = vsyncadd [#allocation11], 0
          %s428 = sshll.u32 %s3, 4
          %s429 = int_to_ptr.hbm [resolvable:$true] %s428
          %s430 = sshll.u32 [#allocation10], 4
          %s431 = int_to_ptr.vmem [resolvable:$true] %s430
          %436 = dma.hbm_to_vmem [thread:$0]  %s429, 8192, %s431, [#allocation11], 512, 512, 32
        $region16: #{tpu_custom_call.1} parent=11 // pred_fallthru
          _
        // Predicated region
        $region17: #{tpu_custom_call.1} parent=11 // pred_check
          %p437 = pneg %p170
        $region18: #{tpu_custom_call.1} parent=11 // pred_check_branch
          %439 = sbr.rel (%p437) target = $region20
        $region19: #{tpu_custom_call.1} parent=11 // pred_region
          %441 = vsyncadd [#allocation11], 0
          %s443 = sshll.u32 %s4, 4
          %s444 = int_to_ptr.hbm [resolvable:$true] %s443
          %s445 = sshll.u32 [#allocation12], 4
          %s446 = int_to_ptr.vmem [resolvable:$true] %s445
          %448 = dma.hbm_to_vmem [thread:$0]  %s444, 64, %s446, [#allocation11]
        $region20: #{tpu_custom_call.1} parent=11 // pred_fallthru
          _
        // Predicated region
        $region21: #{tpu_custom_call.1} parent=11 // pred_check
          %p449 = pneg %p191
        $region22: #{tpu_custom_call.1} parent=11 // pred_check_branch
          %451 = sbr.rel (%p449) target = $region24
        $region23: #{tpu_custom_call.1} parent=11 // pred_region
          %453 = vsyncadd [#allocation14], 0
          %s454 = sshll.u32 %s5, 4
          %s455 = int_to_ptr.hbm [resolvable:$true] %s454
          %s456 = sshll.u32 [#allocation13], 4
          %s457 = int_to_ptr.vmem [resolvable:$true] %s456
          %462 = dma.hbm_to_vmem [thread:$0]  %s455, 8192, %s457, [#allocation14], 512, 512, 32
        $region24: #{tpu_custom_call.1} parent=11 // pred_fallthru
          _
        // Predicated region
        $region25: #{tpu_custom_call.1} parent=11 // pred_check
          %p463 = pneg %p212
        $region26: #{tpu_custom_call.1} parent=11 // pred_check_branch
          %465 = sbr.rel (%p463) target = $region28
        $region27: #{tpu_custom_call.1} parent=11 // pred_region
          _
        $region28: #{tpu_custom_call.1} parent=11 // pred_fallthru
          _
        // Predicated region
        $region29: #{tpu_custom_call.1} parent=11 // pred_check
          %p466 = pneg %p233
        $region30: #{tpu_custom_call.1} parent=11 // pred_check_branch
          %468 = sbr.rel (%p466) target = $region32
        $region31: #{tpu_custom_call.1} parent=11 // pred_region
          %470 = vsyncadd [#allocation14], 0
          %s471 = sshll.u32 %s7, 4
          %s472 = int_to_ptr.hbm [resolvable:$true] %s471
          %s473 = sshll.u32 [#allocation15], 4
          %s474 = int_to_ptr.vmem [resolvable:$true] %s473
          %479 = dma.hbm_to_vmem [thread:$0]  %s472, 8192, %s474, [#allocation14], 512, 512, 32
        $region32: #{tpu_custom_call.1} parent=11 // pred_fallthru
          _
        // Predicated region
        $region33: #{tpu_custom_call.1} parent=11 // pred_check
          %p480 = pneg %p254
        $region34: #{tpu_custom_call.1} parent=11 // pred_check_branch
          %482 = sbr.rel (%p480) target = $region36
        $region35: #{tpu_custom_call.1} parent=11 // pred_region
          %484 = vsyncadd [#allocation17], 0
          %s486 = sshll.u32 %s8, 4
          %s487 = int_to_ptr.hbm [resolvable:$true] %s486
          %s488 = sshll.u32 [#allocation16], 4
          %s489 = int_to_ptr.vmem [resolvable:$true] %s488
          %491 = dma.hbm_to_vmem [thread:$0]  %s487, 64, %s489, [#allocation17]
        $region36: #{tpu_custom_call.1} parent=11 // pred_fallthru
          _
        // Predicated region
        $region37: #{tpu_custom_call.1} parent=11 // pred_check
          %p492 = pneg %p275
        $region38: #{tpu_custom_call.1} parent=11 // pred_check_branch
          %494 = sbr.rel (%p492) target = $region40
        $region39: #{tpu_custom_call.1} parent=11 // pred_region
          %496 = vsyncadd [#allocation17], 0
          %s497 = sshll.u32 %s9, 4
          %s498 = int_to_ptr.hbm [resolvable:$true] %s497
          %s499 = sshll.u32 [#allocation18], 4
          %s500 = int_to_ptr.vmem [resolvable:$true] %s499
          %505 = dma.hbm_to_vmem [thread:$0]  %s498, 8192, %s500, [#allocation17], 128, 128, 8
        $region40: #{tpu_custom_call.1} parent=11 // pred_fallthru
          _
        // Predicated region
        $region41: #{tpu_custom_call.1} parent=11 // pred_check
          %p506 = pneg %p296
        $region42: #{tpu_custom_call.1} parent=11 // pred_check_branch
          %508 = sbr.rel (%p506) target = $region44
        $region43: #{tpu_custom_call.1} parent=11 // pred_region
          _
        $region44: #{tpu_custom_call.1} parent=11 // pred_fallthru
          _
        // Predicated region
        $region45: #{tpu_custom_call.1} parent=11 // pred_check
          %p509 = pneg %p317
        $region46: #{tpu_custom_call.1} parent=11 // pred_check_branch
          %511 = sbr.rel (%p509) target = $region48
        $region47: #{tpu_custom_call.1} parent=11 // pred_region
          %513 = vsyncadd [#allocation20], 0
          %s514 = sshll.u32 %s11, 4
          %s515 = int_to_ptr.hbm [resolvable:$true] %s514
          %s516 = sshll.u32 [#allocation19], 4
          %s517 = int_to_ptr.vmem [resolvable:$true] %s516
          %522 = dma.hbm_to_vmem [thread:$0]  %s515, 2048, %s517, [#allocation20], 128, 128, 8
        $region48: #{tpu_custom_call.1} parent=11 // pred_fallthru
          _
        // Predicated region
        $region49: #{tpu_custom_call.1} parent=11 // pred_check
          %p523 = pneg %p338
        $region50: #{tpu_custom_call.1} parent=11 // pred_check_branch
          %525 = sbr.rel (%p523) target = $region52
        $region51: #{tpu_custom_call.1} parent=11 // pred_region
          _
        $region52: #{tpu_custom_call.1} parent=11 // pred_fallthru
          _
        // Predicated region
        $region53: #{tpu_custom_call.1} parent=11 // pred_check
          %p526 = pneg %p359
        $region54: #{tpu_custom_call.1} parent=11 // pred_check_branch
          %528 = sbr.rel (%p526) target = $region56
        $region55: #{tpu_custom_call.1} parent=11 // pred_region
          %530 = vsyncadd [#allocation20], 0
          %s531 = sshll.u32 %s13, 4
          %s532 = int_to_ptr.hbm [resolvable:$true] %s531
          %s533 = sshll.u32 [#allocation21], 4
          %s534 = int_to_ptr.vmem [resolvable:$true] %s533
          %539 = dma.hbm_to_vmem [thread:$0]  %s532, 2048, %s534, [#allocation20], 128, 128, 8
        $region56: #{tpu_custom_call.1} parent=11 // pred_fallthru
          _
        // Predicated region
        $region57: #{tpu_custom_call.1} parent=11 // pred_check
          %p540 = pneg %p380
        $region58: #{tpu_custom_call.1} parent=11 // pred_check_branch
          %542 = sbr.rel (%p540) target = $region60
        $region59: #{tpu_custom_call.1} parent=11 // pred_region
          _
        $region60: #{tpu_custom_call.1} parent=11 // pred_fallthru
          _
      $region12: #{tpu_custom_call.1} parent=5 // pred_fallthru
        _
      %p543 = scmp.lt.s32.totalorder %s34, 2
      // Predicated region
      $region61: #{tpu_custom_call.1} parent=5 // pred_check
        %p544 = pneg %p543
      $region62: #{tpu_custom_call.1} parent=5 // pred_check_branch
        %546 = sbr.rel (%p544) target = $region64
      $region63: #{tpu_custom_call.1} parent=5 // pred_region
        // Predicated region
        $region65: #{tpu_custom_call.1} parent=63 // pred_check
          %p547 = pneg %p68
        $region66: #{tpu_custom_call.1} parent=63 // pred_check_branch
          %549 = sbr.rel (%p547) target = $region68
        $region67: #{tpu_custom_call.1} parent=63 // pred_region
          %s550 = sand.u32 %s58, 1
          %s551 = scalar_lea.sflag [#allocation5], %s550
          %s552 = sand.u32 %s58, 1
          %s553 = smul.addr %s552, 8
          %s554 = scalar_lea.vmem [#allocation4], %s553
          %556 = vsyncadd %s551, 0
          %s557 = sadd.s32 %s42, %s41
          %s558 = smul.addr %s557, 8
          %s559 = scalar_lea.hbm %s0, %s558
          %s561 = sshll.u32 %s559, 4
          %s562 = int_to_ptr.hbm [resolvable:$true] %s561
          %s563 = sshll.u32 %s554, 4
          %s564 = int_to_ptr.vmem [resolvable:$true] %s563
          %566 = dma.hbm_to_vmem [thread:$0]  %s562, 128, %s564, %s551
        $region68: #{tpu_custom_call.1} parent=63 // pred_fallthru
          _
        // Predicated region
        $region69: #{tpu_custom_call.1} parent=63 // pred_check
          %p567 = pneg %p94
        $region70: #{tpu_custom_call.1} parent=63 // pred_check_branch
          %569 = sbr.rel (%p567) target = $region72
        $region71: #{tpu_custom_call.1} parent=63 // pred_region
          %s570 = sand.u32 %s34, 1
          %s571 = scalar_lea.sflag [#allocation8], %s570
          %s572 = sand.u32 %s84, 1
          %s573 = smul.addr %s572, 8
          %s574 = scalar_lea.vmem [#allocation7], %s573
          %576 = vsyncadd %s571, 0
          %s577 = smul.addr %s41, 8
          %s578 = scalar_lea.hbm %s1, %s577
          %s580 = sshll.u32 %s578, 4
          %s581 = int_to_ptr.hbm [resolvable:$true] %s580
          %s582 = sshll.u32 %s574, 4
          %s583 = int_to_ptr.vmem [resolvable:$true] %s582
          %585 = dma.hbm_to_vmem [thread:$0]  %s581, 128, %s583, %s571
        $region72: #{tpu_custom_call.1} parent=63 // pred_fallthru
          _
        // Predicated region
        $region73: #{tpu_custom_call.1} parent=63 // pred_check
          %p586 = pneg %p122
        $region74: #{tpu_custom_call.1} parent=63 // pred_check_branch
          %588 = sbr.rel (%p586) target = $region76
        $region75: #{tpu_custom_call.1} parent=63 // pred_region
          %s589 = sand.u32 %s34, 1
          %s590 = scalar_lea.sflag [#allocation8], %s589
          %s591 = sand.u32 %s112, 1
          %s592 = smul.addr %s591, 4
          %s593 = scalar_lea.vmem [#allocation9], %s592
          %595 = vsyncadd %s590, 0
          %s596 = sadd.s32 %s42, %s41
          %s597 = smul.addr %s596, 4
          %s598 = scalar_lea.hbm %s2, %s597
          %s600 = sshll.u32 %s598, 4
          %s601 = int_to_ptr.hbm [resolvable:$true] %s600
          %s602 = sshll.u32 %s593, 4
          %s603 = int_to_ptr.vmem [resolvable:$true] %s602
          %605 = dma.hbm_to_vmem [thread:$0]  %s601, 64, %s603, %s590
        $region76: #{tpu_custom_call.1} parent=63 // pred_fallthru
          _
      $region64: #{tpu_custom_call.1} parent=5 // pred_fallthru
        _
      %p606 = scmp.le.s32.totalorder 1, %s34
      %p607 = scmp.lt.s32.totalorder %s34, 3
      %p608 = pnand %p606, %p607
      %p609 = pneg %p608
      // Predicated region
      $region77: #{tpu_custom_call.1} parent=5 // pred_check
        _
      $region78: #{tpu_custom_call.1} parent=5 // pred_check_branch
        %611 = sbr.rel (%p608) target = $region80
      $region79: #{tpu_custom_call.1} parent=5 // pred_region
        %s612 = ssub.s32 %s34, 1
        %s613 = sand.u32 %s61, 1
        %s614 = scalar_lea.sflag [#allocation5], %s613
        %s615 = sand.u32 %s61, 1
        %s616 = smul.addr %s615, 8
        %s617 = scalar_lea.vmem [#allocation4], %s616
        // Predicated region
        $region81: #{tpu_custom_call.1} parent=79 // pred_check
          %p618 = pneg %p74
        $region82: #{tpu_custom_call.1} parent=79 // pred_check_branch
          %620 = sbr.rel (%p618) target = $region84
        $region83: #{tpu_custom_call.1} parent=79 // pred_region
          %622 = dma.done %s614, 128
        $region84: #{tpu_custom_call.1} parent=79 // pred_fallthru
          _
        %s623 = sand.u32 %s39, 1
        %s624 = scalar_lea.sflag [#allocation8], %s623
        %s625 = sand.u32 %s87, 1
        %s626 = smul.addr %s625, 8
        %s627 = scalar_lea.vmem [#allocation7], %s626
        // Predicated region
        $region85: #{tpu_custom_call.1} parent=79 // pred_check
          %p628 = pneg %p100
        $region86: #{tpu_custom_call.1} parent=79 // pred_check_branch
          %630 = sbr.rel (%p628) target = $region88
        $region87: #{tpu_custom_call.1} parent=79 // pred_region
          %632 = dma.done %s624, 128
        $region88: #{tpu_custom_call.1} parent=79 // pred_fallthru
          _
        %s633 = sand.u32 %s39, 1
        %s634 = scalar_lea.sflag [#allocation8], %s633
        %s635 = sand.u32 %s115, 1
        %s636 = smul.addr %s635, 4
        %s637 = scalar_lea.vmem [#allocation9], %s636
        // Predicated region
        $region89: #{tpu_custom_call.1} parent=79 // pred_check
          %p638 = pneg %p128
        $region90: #{tpu_custom_call.1} parent=79 // pred_check_branch
          %640 = sbr.rel (%p638) target = $region92
        $region91: #{tpu_custom_call.1} parent=79 // pred_region
          %642 = dma.done %s634, 64
        $region92: #{tpu_custom_call.1} parent=79 // pred_fallthru
          _
        // Predicated region
        $region93: #{tpu_custom_call.1} parent=79 // pred_check
          %p643 = pneg %p149
        $region94: #{tpu_custom_call.1} parent=79 // pred_check_branch
          %645 = sbr.rel (%p643) target = $region96
        $region95: #{tpu_custom_call.1} parent=79 // pred_region
          %647 = dma.done [#allocation11], 8192
        $region96: #{tpu_custom_call.1} parent=79 // pred_fallthru
          _
        // Predicated region
        $region97: #{tpu_custom_call.1} parent=79 // pred_check
          %p648 = pneg %p170
        $region98: #{tpu_custom_call.1} parent=79 // pred_check_branch
          %650 = sbr.rel (%p648) target = $region100
        $region99: #{tpu_custom_call.1} parent=79 // pred_region
          %652 = dma.done [#allocation11], 64
        $region100: #{tpu_custom_call.1} parent=79 // pred_fallthru
          _
        // Predicated region
        $region101: #{tpu_custom_call.1} parent=79 // pred_check
          %p653 = pneg %p191
        $region102: #{tpu_custom_call.1} parent=79 // pred_check_branch
          %655 = sbr.rel (%p653) target = $region104
        $region103: #{tpu_custom_call.1} parent=79 // pred_region
          %657 = dma.done [#allocation14], 8192
        $region104: #{tpu_custom_call.1} parent=79 // pred_fallthru
          _
        // Predicated region
        $region105: #{tpu_custom_call.1} parent=79 // pred_check
          %p658 = pneg %p233
        $region106: #{tpu_custom_call.1} parent=79 // pred_check_branch
          %660 = sbr.rel (%p658) target = $region108
        $region107: #{tpu_custom_call.1} parent=79 // pred_region
          %662 = dma.done [#allocation14], 8192
        $region108: #{tpu_custom_call.1} parent=79 // pred_fallthru
          _
        // Predicated region
        $region109: #{tpu_custom_call.1} parent=79 // pred_check
          %p663 = pneg %p254
        $region110: #{tpu_custom_call.1} parent=79 // pred_check_branch
          %665 = sbr.rel (%p663) target = $region112
        $region111: #{tpu_custom_call.1} parent=79 // pred_region
          %667 = dma.done [#allocation17], 64
        $region112: #{tpu_custom_call.1} parent=79 // pred_fallthru
          _
        // Predicated region
        $region113: #{tpu_custom_call.1} parent=79 // pred_check
          %p668 = pneg %p275
        $region114: #{tpu_custom_call.1} parent=79 // pred_check_branch
          %670 = sbr.rel (%p668) target = $region116
        $region115: #{tpu_custom_call.1} parent=79 // pred_region
          %672 = dma.done [#allocation17], 8192
        $region116: #{tpu_custom_call.1} parent=79 // pred_fallthru
          _
        // Predicated region
        $region117: #{tpu_custom_call.1} parent=79 // pred_check
          %p673 = pneg %p317
        $region118: #{tpu_custom_call.1} parent=79 // pred_check_branch
          %675 = sbr.rel (%p673) target = $region120
        $region119: #{tpu_custom_call.1} parent=79 // pred_region
          %677 = dma.done [#allocation20], 2048
        $region120: #{tpu_custom_call.1} parent=79 // pred_fallthru
          _
        // Predicated region
        $region121: #{tpu_custom_call.1} parent=79 // pred_check
          %p678 = pneg %p359
        $region122: #{tpu_custom_call.1} parent=79 // pred_check_branch
          %680 = sbr.rel (%p678) target = $region124
        $region123: #{tpu_custom_call.1} parent=79 // pred_region
          %682 = dma.done [#allocation20], 2048
        $region124: #{tpu_custom_call.1} parent=79 // pred_fallthru
          _
        %s683 = sand.u32 %s61, 1
        %s684 = scalar_lea.sflag [#allocation5], %s683
        %s685 = sand.u32 %s61, 1
        %s686 = smul.addr %s685, 8
        %s687 = scalar_lea.vmem [#allocation4], %s686
        %p688 = pneg %p74
        %p689 = pneg %p71
        %s690 = sand.u32 %s39, 1
        %s691 = scalar_lea.sflag [#allocation8], %s690
        %s692 = sand.u32 %s87, 1
        %s693 = smul.addr %s692, 8
        %s694 = scalar_lea.vmem [#allocation7], %s693
        %p695 = pneg %p100
        %p696 = pneg %p97
        %s697 = sand.u32 %s39, 1
        %s698 = scalar_lea.sflag [#allocation8], %s697
        %s699 = sand.u32 %s115, 1
        %s700 = smul.addr %s699, 4
        %s701 = scalar_lea.vmem [#allocation9], %s700
        %p702 = pneg %p128
        %p703 = pneg %p125
        %p704 = pneg %p149
        %p705 = pneg %p146
        %p706 = pneg %p170
        %p707 = pneg %p167
        %p708 = pneg %p191
        %p709 = pneg %p188
        %p710 = pneg %p212
        %p711 = pneg %p209
        %p712 = pneg %p233
        %p713 = pneg %p230
        %p714 = pneg %p254
        %p715 = pneg %p251
        %p716 = pneg %p275
        %p717 = pneg %p272
        %p718 = pneg %p296
        %p719 = pneg %p293
        %p720 = pneg %p317
        %p721 = pneg %p314
        %p722 = pneg %p338
        %p723 = pneg %p335
        %p724 = pneg %p359
        %p725 = pneg %p356
        %p726 = pneg %p380
        %p727 = pneg %p377
        %p728 = pneg %p408
        %p729 = pneg %p405
        %s730 = sand.u32 %s395, 1
        %s731 = scalar_lea.sflag [#allocation6], %s730
        %s732 = sand.u32 %s395, 1
        %s733 = smul.addr %s732, 8
        %s734 = scalar_lea.vmem [#allocation22], %s733
        %p735 = scmp.eq.s32.totalorder %s44, 0
        // Predicated region
        $region125: #{tpu_custom_call.1} parent=79 // pred_check
          %p736 = pneg %p735
        $region126: #{tpu_custom_call.1} parent=79 // pred_check_branch
          %738 = sbr.rel (%p736) target = $region128
        $region127: #{tpu_custom_call.1} parent=79 // pred_region
          %v739 = vld [vmem:[%s627] sm:$0xff]
          %v740 = vld [vmem:[#allocation13] sm:$0xff]
          %v741 = vld [vmem:[#allocation13 + $0x8] sm:$0xff]
          %v742 = vld [vmem:[#allocation13 + $0x10] sm:$0xff]
          %v743 = vld [vmem:[#allocation13 + $0x18] sm:$0xff]
          %v744 = vld [vmem:[#allocation13 + $0x20] sm:$0xff]
          %v745 = vld [vmem:[#allocation13 + $0x28] sm:$0xff]
          %v746 = vld [vmem:[#allocation13 + $0x30] sm:$0xff]
          %v747 = vld [vmem:[#allocation13 + $0x38] sm:$0xff]
          %v748 = vld [vmem:[#allocation13 + $0x40] sm:$0xff]
          %v749 = vld [vmem:[#allocation13 + $0x48] sm:$0xff]
          %v750 = vld [vmem:[#allocation13 + $0x50] sm:$0xff]
          %v751 = vld [vmem:[#allocation13 + $0x58] sm:$0xff]
          %v752 = vld [vmem:[#allocation13 + $0x60] sm:$0xff]
          %v753 = vld [vmem:[#allocation13 + $0x68] sm:$0xff]
          %v754 = vld [vmem:[#allocation13 + $0x70] sm:$0xff]
          %v755 = vld [vmem:[#allocation13 + $0x78] sm:$0xff]
          %v756 = vld [vmem:[#allocation13 + $0x80] sm:$0xff]
          %v757 = vld [vmem:[#allocation13 + $0x88] sm:$0xff]
          %v758 = vld [vmem:[#allocation13 + $0x90] sm:$0xff]
          %v759 = vld [vmem:[#allocation13 + $0x98] sm:$0xff]
          %v760 = vld [vmem:[#allocation13 + $0xa0] sm:$0xff]
          %v761 = vld [vmem:[#allocation13 + $0xa8] sm:$0xff]
          %v762 = vld [vmem:[#allocation13 + $0xb0] sm:$0xff]
          %v763 = vld [vmem:[#allocation13 + $0xb8] sm:$0xff]
          %v764 = vld [vmem:[#allocation13 + $0xc0] sm:$0xff]
          %v765 = vld [vmem:[#allocation13 + $0xc8] sm:$0xff]
          %v766 = vld [vmem:[#allocation13 + $0xd0] sm:$0xff]
          %v767 = vld [vmem:[#allocation13 + $0xd8] sm:$0xff]
          %v768 = vld [vmem:[#allocation13 + $0xe0] sm:$0xff]
          %v769 = vld [vmem:[#allocation13 + $0xe8] sm:$0xff]
          %v770 = vld [vmem:[#allocation13 + $0xf0] sm:$0xff]
          %v771 = vld [vmem:[#allocation13 + $0xf8] sm:$0xff]
          %v772 = vld [vmem:[#allocation13 + $0x100] sm:$0xff]
          %v773 = vld [vmem:[#allocation13 + $0x108] sm:$0xff]
          %v774 = vld [vmem:[#allocation13 + $0x110] sm:$0xff]
          %v775 = vld [vmem:[#allocation13 + $0x118] sm:$0xff]
          %v776 = vld [vmem:[#allocation13 + $0x120] sm:$0xff]
          %v777 = vld [vmem:[#allocation13 + $0x128] sm:$0xff]
          %v778 = vld [vmem:[#allocation13 + $0x130] sm:$0xff]
          %v779 = vld [vmem:[#allocation13 + $0x138] sm:$0xff]
          %v780 = vld [vmem:[#allocation13 + $0x140] sm:$0xff]
          %v781 = vld [vmem:[#allocation13 + $0x148] sm:$0xff]
          %v782 = vld [vmem:[#allocation13 + $0x150] sm:$0xff]
          %v783 = vld [vmem:[#allocation13 + $0x158] sm:$0xff]
          %v784 = vld [vmem:[#allocation13 + $0x160] sm:$0xff]
          %v785 = vld [vmem:[#allocation13 + $0x168] sm:$0xff]
          %v786 = vld [vmem:[#allocation13 + $0x170] sm:$0xff]
          %v787 = vld [vmem:[#allocation13 + $0x178] sm:$0xff]
          %v788 = vld [vmem:[#allocation13 + $0x180] sm:$0xff]
          %v789 = vld [vmem:[#allocation13 + $0x188] sm:$0xff]
          %v790 = vld [vmem:[#allocation13 + $0x190] sm:$0xff]
          %v791 = vld [vmem:[#allocation13 + $0x198] sm:$0xff]
          %v792 = vld [vmem:[#allocation13 + $0x1a0] sm:$0xff]
          %v793 = vld [vmem:[#allocation13 + $0x1a8] sm:$0xff]
          %v794 = vld [vmem:[#allocation13 + $0x1b0] sm:$0xff]
          %v795 = vld [vmem:[#allocation13 + $0x1b8] sm:$0xff]
          %v796 = vld [vmem:[#allocation13 + $0x1c0] sm:$0xff]
          %v797 = vld [vmem:[#allocation13 + $0x1c8] sm:$0xff]
          %v798 = vld [vmem:[#allocation13 + $0x1d0] sm:$0xff]
          %v799 = vld [vmem:[#allocation13 + $0x1d8] sm:$0xff]
          %v800 = vld [vmem:[#allocation13 + $0x1e0] sm:$0xff]
          %v801 = vld [vmem:[#allocation13 + $0x1e8] sm:$0xff]
          %v802 = vld [vmem:[#allocation13 + $0x1f0] sm:$0xff]
          %v803 = vld [vmem:[#allocation13 + $0x1f8] sm:$0xff]
          %v804 = vld [vmem:[%s6] sm:$0xf]
          %v806 = vperm.slane %v804, 0
          %v807 = vperm.slane %v804, 1
          %v808 = vperm.slane %v804, 2
          %v809 = vperm.slane %v804, 3
          %814 = vmatpush.msra.mxu0 %v800
          %815 = vmatpush.msra.mxu0 %v796
          %816 = vmatpush.msra.mxu0 %v792
          %817 = vmatpush.msra.mxu0 %v788
          %818 = vmatpush.msra.mxu0 %v784
          %819 = vmatpush.msra.mxu0 %v780
          %820 = vmatpush.msra.mxu0 %v776
          %821 = vmatpush.msra.mxu0 %v772
          %822 = vmatpush.msra.mxu0 %v768
          %823 = vmatpush.msra.mxu0 %v764
          %824 = vmatpush.msra.mxu0 %v760
          %825 = vmatpush.msra.mxu0 %v756
          %826 = vmatpush.msra.mxu0 %v752
          %827 = vmatpush.msra.mxu0 %v748
          %828 = vmatpush.msra.mxu0 %v744
          %829 = vmatpush.msra.mxu0 %v740
          %830 = vmatmul.f32.gmra.mxu0 %v739
          %v831 = vpop.f32.mrf.mxu0
          %v832 = vadd.f32 %v806, %v831
          %833 = vdwg.mxu0
          %834 = vmatpush.msra.mxu0 %v801
          %835 = vmatpush.msra.mxu0 %v797
          %836 = vmatpush.msra.mxu0 %v793
          %837 = vmatpush.msra.mxu0 %v789
          %838 = vmatpush.msra.mxu0 %v785
          %839 = vmatpush.msra.mxu0 %v781
          %840 = vmatpush.msra.mxu0 %v777
          %841 = vmatpush.msra.mxu0 %v773
          %842 = vmatpush.msra.mxu0 %v769
          %843 = vmatpush.msra.mxu0 %v765
          %844 = vmatpush.msra.mxu0 %v761
          %845 = vmatpush.msra.mxu0 %v757
          %846 = vmatpush.msra.mxu0 %v753
          %847 = vmatpush.msra.mxu0 %v749
          %848 = vmatpush.msra.mxu0 %v745
          %849 = vmatpush.msra.mxu0 %v741
          %850 = vmatmul.f32.gmra.mxu0 %v739
          %v851 = vpop.f32.mrf.mxu0
          %v852 = vadd.f32 %v807, %v851
          %853 = vdwg.mxu0
          %854 = vmatpush.msra.mxu0 %v802
          %855 = vmatpush.msra.mxu0 %v798
          %856 = vmatpush.msra.mxu0 %v794
          %857 = vmatpush.msra.mxu0 %v790
          %858 = vmatpush.msra.mxu0 %v786
          %859 = vmatpush.msra.mxu0 %v782
          %860 = vmatpush.msra.mxu0 %v778
          %861 = vmatpush.msra.mxu0 %v774
          %862 = vmatpush.msra.mxu0 %v770
          %863 = vmatpush.msra.mxu0 %v766
          %864 = vmatpush.msra.mxu0 %v762
          %865 = vmatpush.msra.mxu0 %v758
          %866 = vmatpush.msra.mxu0 %v754
          %867 = vmatpush.msra.mxu0 %v750
          %868 = vmatpush.msra.mxu0 %v746
          %869 = vmatpush.msra.mxu0 %v742
          %870 = vmatmul.f32.gmra.mxu0 %v739
          %v871 = vpop.f32.mrf.mxu0
          %v872 = vadd.f32 %v808, %v871
          %873 = vdwg.mxu0
          %874 = vmatpush.msra.mxu0 %v803
          %875 = vmatpush.msra.mxu0 %v799
          %876 = vmatpush.msra.mxu0 %v795
          %877 = vmatpush.msra.mxu0 %v791
          %878 = vmatpush.msra.mxu0 %v787
          %879 = vmatpush.msra.mxu0 %v783
          %880 = vmatpush.msra.mxu0 %v779
          %881 = vmatpush.msra.mxu0 %v775
          %882 = vmatpush.msra.mxu0 %v771
          %883 = vmatpush.msra.mxu0 %v767
          %884 = vmatpush.msra.mxu0 %v763
          %885 = vmatpush.msra.mxu0 %v759
          %886 = vmatpush.msra.mxu0 %v755
          %887 = vmatpush.msra.mxu0 %v751
          %888 = vmatpush.msra.mxu0 %v747
          %889 = vmatpush.msra.mxu0 %v743
          %890 = vmatmul.f32.gmra.mxu0 %v739
          %v891 = vpop.f32.mrf.mxu0
          %v892 = vadd.f32 %v809, %v891
          %893 = vdwg.mxu0
          %v894 = vld [vmem:[#allocation15] sm:$0xff]
          %v895 = vld [vmem:[#allocation15 + $0x8] sm:$0xff]
          %v896 = vld [vmem:[#allocation15 + $0x10] sm:$0xff]
          %v897 = vld [vmem:[#allocation15 + $0x18] sm:$0xff]
          %v898 = vld [vmem:[#allocation15 + $0x20] sm:$0xff]
          %v899 = vld [vmem:[#allocation15 + $0x28] sm:$0xff]
          %v900 = vld [vmem:[#allocation15 + $0x30] sm:$0xff]
          %v901 = vld [vmem:[#allocation15 + $0x38] sm:$0xff]
          %v902 = vld [vmem:[#allocation15 + $0x40] sm:$0xff]
          %v903 = vld [vmem:[#allocation15 + $0x48] sm:$0xff]
          %v904 = vld [vmem:[#allocation15 + $0x50] sm:$0xff]
          %v905 = vld [vmem:[#allocation15 + $0x58] sm:$0xff]
          %v906 = vld [vmem:[#allocation15 + $0x60] sm:$0xff]
          %v907 = vld [vmem:[#allocation15 + $0x68] sm:$0xff]
          %v908 = vld [vmem:[#allocation15 + $0x70] sm:$0xff]
          %v909 = vld [vmem:[#allocation15 + $0x78] sm:$0xff]
          %v910 = vld [vmem:[#allocation15 + $0x80] sm:$0xff]
          %v911 = vld [vmem:[#allocation15 + $0x88] sm:$0xff]
          %v912 = vld [vmem:[#allocation15 + $0x90] sm:$0xff]
          %v913 = vld [vmem:[#allocation15 + $0x98] sm:$0xff]
          %v914 = vld [vmem:[#allocation15 + $0xa0] sm:$0xff]
          %v915 = vld [vmem:[#allocation15 + $0xa8] sm:$0xff]
          %v916 = vld [vmem:[#allocation15 + $0xb0] sm:$0xff]
          %v917 = vld [vmem:[#allocation15 + $0xb8] sm:$0xff]
          %v918 = vld [vmem:[#allocation15 + $0xc0] sm:$0xff]
          %v919 = vld [vmem:[#allocation15 + $0xc8] sm:$0xff]
          %v920 = vld [vmem:[#allocation15 + $0xd0] sm:$0xff]
          %v921 = vld [vmem:[#allocation15 + $0xd8] sm:$0xff]
          %v922 = vld [vmem:[#allocation15 + $0xe0] sm:$0xff]
          %v923 = vld [vmem:[#allocation15 + $0xe8] sm:$0xff]
          %v924 = vld [vmem:[#allocation15 + $0xf0] sm:$0xff]
          %v925 = vld [vmem:[#allocation15 + $0xf8] sm:$0xff]
          %v926 = vld [vmem:[#allocation15 + $0x100] sm:$0xff]
          %v927 = vld [vmem:[#allocation15 + $0x108] sm:$0xff]
          %v928 = vld [vmem:[#allocation15 + $0x110] sm:$0xff]
          %v929 = vld [vmem:[#allocation15 + $0x118] sm:$0xff]
          %v930 = vld [vmem:[#allocation15 + $0x120] sm:$0xff]
          %v931 = vld [vmem:[#allocation15 + $0x128] sm:$0xff]
          %v932 = vld [vmem:[#allocation15 + $0x130] sm:$0xff]
          %v933 = vld [vmem:[#allocation15 + $0x138] sm:$0xff]
          %v934 = vld [vmem:[#allocation15 + $0x140] sm:$0xff]
          %v935 = vld [vmem:[#allocation15 + $0x148] sm:$0xff]
          %v936 = vld [vmem:[#allocation15 + $0x150] sm:$0xff]
          %v937 = vld [vmem:[#allocation15 + $0x158] sm:$0xff]
          %v938 = vld [vmem:[#allocation15 + $0x160] sm:$0xff]
          %v939 = vld [vmem:[#allocation15 + $0x168] sm:$0xff]
          %v940 = vld [vmem:[#allocation15 + $0x170] sm:$0xff]
          %v941 = vld [vmem:[#allocation15 + $0x178] sm:$0xff]
          %v942 = vld [vmem:[#allocation15 + $0x180] sm:$0xff]
          %v943 = vld [vmem:[#allocation15 + $0x188] sm:$0xff]
          %v944 = vld [vmem:[#allocation15 + $0x190] sm:$0xff]
          %v945 = vld [vmem:[#allocation15 + $0x198] sm:$0xff]
          %v946 = vld [vmem:[#allocation15 + $0x1a0] sm:$0xff]
          %v947 = vld [vmem:[#allocation15 + $0x1a8] sm:$0xff]
          %v948 = vld [vmem:[#allocation15 + $0x1b0] sm:$0xff]
          %v949 = vld [vmem:[#allocation15 + $0x1b8] sm:$0xff]
          %v950 = vld [vmem:[#allocation15 + $0x1c0] sm:$0xff]
          %v951 = vld [vmem:[#allocation15 + $0x1c8] sm:$0xff]
          %v952 = vld [vmem:[#allocation15 + $0x1d0] sm:$0xff]
          %v953 = vld [vmem:[#allocation15 + $0x1d8] sm:$0xff]
          %v954 = vld [vmem:[#allocation15 + $0x1e0] sm:$0xff]
          %v955 = vld [vmem:[#allocation15 + $0x1e8] sm:$0xff]
          %v956 = vld [vmem:[#allocation15 + $0x1f0] sm:$0xff]
          %v957 = vld [vmem:[#allocation15 + $0x1f8] sm:$0xff]
          %v958 = vld [vmem:[#allocation16] sm:$0xf]
          %v960 = vperm.slane %v958, 0
          %v961 = vperm.slane %v958, 1
          %v962 = vperm.slane %v958, 2
          %v963 = vperm.slane %v958, 3
          %968 = vmatpush.msra.mxu0 %v954
          %969 = vmatpush.msra.mxu0 %v950
          %970 = vmatpush.msra.mxu0 %v946
          %971 = vmatpush.msra.mxu0 %v942
          %972 = vmatpush.msra.mxu0 %v938
          %973 = vmatpush.msra.mxu0 %v934
          %974 = vmatpush.msra.mxu0 %v930
          %975 = vmatpush.msra.mxu0 %v926
          %976 = vmatpush.msra.mxu0 %v922
          %977 = vmatpush.msra.mxu0 %v918
          %978 = vmatpush.msra.mxu0 %v914
          %979 = vmatpush.msra.mxu0 %v910
          %980 = vmatpush.msra.mxu0 %v906
          %981 = vmatpush.msra.mxu0 %v902
          %982 = vmatpush.msra.mxu0 %v898
          %983 = vmatpush.msra.mxu0 %v894
          %984 = vmatmul.f32.gmra.mxu0 %v739
          %v985 = vpop.f32.mrf.mxu0
          %v986 = vadd.f32 %v960, %v985
          %987 = vdwg.mxu0
          %988 = vmatpush.msra.mxu0 %v955
          %989 = vmatpush.msra.mxu0 %v951
          %990 = vmatpush.msra.mxu0 %v947
          %991 = vmatpush.msra.mxu0 %v943
          %992 = vmatpush.msra.mxu0 %v939
          %993 = vmatpush.msra.mxu0 %v935
          %994 = vmatpush.msra.mxu0 %v931
          %995 = vmatpush.msra.mxu0 %v927
          %996 = vmatpush.msra.mxu0 %v923
          %997 = vmatpush.msra.mxu0 %v919
          %998 = vmatpush.msra.mxu0 %v915
          %999 = vmatpush.msra.mxu0 %v911
          %1000 = vmatpush.msra.mxu0 %v907
          %1001 = vmatpush.msra.mxu0 %v903
          %1002 = vmatpush.msra.mxu0 %v899
          %1003 = vmatpush.msra.mxu0 %v895
          %1004 = vmatmul.f32.gmra.mxu0 %v739
          %v1005 = vpop.f32.mrf.mxu0
          %v1006 = vadd.f32 %v961, %v1005
          %1007 = vdwg.mxu0
          %1008 = vmatpush.msra.mxu0 %v956
          %1009 = vmatpush.msra.mxu0 %v952
          %1010 = vmatpush.msra.mxu0 %v948
          %1011 = vmatpush.msra.mxu0 %v944
          %1012 = vmatpush.msra.mxu0 %v940
          %1013 = vmatpush.msra.mxu0 %v936
          %1014 = vmatpush.msra.mxu0 %v932
          %1015 = vmatpush.msra.mxu0 %v928
          %1016 = vmatpush.msra.mxu0 %v924
          %1017 = vmatpush.msra.mxu0 %v920
          %1018 = vmatpush.msra.mxu0 %v916
          %1019 = vmatpush.msra.mxu0 %v912
          %1020 = vmatpush.msra.mxu0 %v908
          %1021 = vmatpush.msra.mxu0 %v904
          %1022 = vmatpush.msra.mxu0 %v900
          %1023 = vmatpush.msra.mxu0 %v896
          %1024 = vmatmul.f32.gmra.mxu0 %v739
          %v1025 = vpop.f32.mrf.mxu0
          %v1026 = vadd.f32 %v962, %v1025
          %1027 = vdwg.mxu0
          %1028 = vmatpush.msra.mxu0 %v957
          %1029 = vmatpush.msra.mxu0 %v953
          %1030 = vmatpush.msra.mxu0 %v949
          %1031 = vmatpush.msra.mxu0 %v945
          %1032 = vmatpush.msra.mxu0 %v941
          %1033 = vmatpush.msra.mxu0 %v937
          %1034 = vmatpush.msra.mxu0 %v933
          %1035 = vmatpush.msra.mxu0 %v929
          %1036 = vmatpush.msra.mxu0 %v925
          %1037 = vmatpush.msra.mxu0 %v921
          %1038 = vmatpush.msra.mxu0 %v917
          %1039 = vmatpush.msra.mxu0 %v913
          %1040 = vmatpush.msra.mxu0 %v909
          %1041 = vmatpush.msra.mxu0 %v905
          %1042 = vmatpush.msra.mxu0 %v901
          %1043 = vmatpush.msra.mxu0 %v897
          %1044 = vmatmul.f32.gmra.mxu0 %v739
          %v1045 = vpop.f32.mrf.mxu0
          %v1046 = vadd.f32 %v963, %v1045
          %1047 = vdwg.mxu0
          %v1048 = vrot.slane %v872, 4
          %vm1049 = vcmask 1047556
          %v1050 = vsel %vm1049, %v1048, %v832
          %v1051 = vrot.slane %v832, 4
          %v1052 = vsel %vm1049, %v872, %v1051
          %v1054 = vunpack.c.l.s4 1983009808
          %v1055 = vunpack.c.0.s8 %v1054
          %v1056 = vperm.slane %v1050, %v1055
          %v1058 = vunpack.c.l.s4 1983009808
          %v1059 = vunpack.c.0.s8 %v1058
          %v1060 = vperm.slane %v1052, %v1059
          %v1061 = vrot.slane %v892, 4
          %v1062 = vsel %vm1049, %v1061, %v852
          %v1063 = vrot.slane %v852, 4
          %v1064 = vsel %vm1049, %v892, %v1063
          %v1066 = vunpack.c.l.s4 1983009808
          %v1067 = vunpack.c.0.s8 %v1066
          %v1068 = vperm.slane %v1062, %v1067
          %v1070 = vunpack.c.l.s4 1983009808
          %v1071 = vunpack.c.0.s8 %v1070
          %v1072 = vperm.slane %v1064, %v1071
          %v1073 = vrot.slane %v1068, 4
          %v1074 = vsel %vm1049, %v1073, %v1056
          %v1075 = vrot.slane %v1056, 4
          %v1076 = vsel %vm1049, %v1068, %v1075
          %v1078 = vunpack.c.l.s4 1934713408
          %v1079 = vunpack.c.0.s8 %v1078
          %v1080 = vperm.slane %v1074, %v1079
          %v1082 = vunpack.c.l.s4 1934713408
          %v1083 = vunpack.c.0.s8 %v1082
          %v1084 = vperm.slane %v1076, %v1083
          %v1085 = vrot.slane %v1072, 4
          %v1086 = vsel %vm1049, %v1085, %v1060
          %v1087 = vrot.slane %v1060, 4
          %v1088 = vsel %vm1049, %v1072, %v1087
          %v1090 = vunpack.c.l.s4 1934713408
          %v1091 = vunpack.c.0.s8 %v1090
          %v1092 = vperm.slane %v1086, %v1091
          %v1094 = vunpack.c.l.s4 1934713408
          %v1095 = vunpack.c.0.s8 %v1094
          %v1096 = vperm.slane %v1088, %v1095
          %v1097 = vrot.slane %v1080, 4
          %v1098 = vsel %vm1049, 0.0, %v1097
          %v1099 = vrot.slane %v1084, 4
          %v1100 = vsel %vm1049, 0.0, %v1099
          %v1101 = vrot.slane %v1092, 4
          %v1102 = vsel %vm1049, 0.0, %v1101
          %v1103 = vrot.slane %v1096, 4
          %v1104 = vsel %vm1049, 0.0, %v1103
          %v1105 = vsel %vm1049, %v1099, %v1080
          %v1107 = vunpack.c.l.s4 1983009808
          %v1108 = vunpack.c.0.s8 %v1107
          %v1109 = vperm.slane %v1105, %v1108
          %v1110 = vrot.slane %v1100, 4
          %v1111 = vsel %vm1049, %v1110, %v1098
          %v1113 = vunpack.c.l.s4 1983009808
          %v1114 = vunpack.c.0.s8 %v1113
          %v1115 = vperm.slane %v1111, %v1114
          %v1116 = vsel %vm1049, %v1103, %v1092
          %v1118 = vunpack.c.l.s4 1983009808
          %v1119 = vunpack.c.0.s8 %v1118
          %v1120 = vperm.slane %v1116, %v1119
          %v1121 = vrot.slane %v1104, 4
          %v1122 = vsel %vm1049, %v1121, %v1102
          %v1124 = vunpack.c.l.s4 1983009808
          %v1125 = vunpack.c.0.s8 %v1124
          %v1126 = vperm.slane %v1122, %v1125
          %v1127 = vrot.slane %v1115, 4
          %v1128 = vsel %vm1049, %v1127, %v1109
          %v1129 = vrot.slane %v1109, 4
          %v1130 = vsel %vm1049, %v1115, %v1129
          %v1132 = vunpack.c.l.s4 1934713408
          %v1133 = vunpack.c.0.s8 %v1132
          %v1134 = vperm.slane %v1128, %v1133
          %v1136 = vunpack.c.l.s4 1934713408
          %v1137 = vunpack.c.0.s8 %v1136
          %v1138 = vperm.slane %v1130, %v1137
          %v1139 = vrot.slane %v1126, 4
          %v1140 = vsel %vm1049, %v1139, %v1120
          %v1141 = vrot.slane %v1120, 4
          %v1142 = vsel %vm1049, %v1126, %v1141
          %v1144 = vunpack.c.l.s4 1934713408
          %v1145 = vunpack.c.0.s8 %v1144
          %v1146 = vperm.slane %v1140, %v1145
          %v1148 = vunpack.c.l.s4 1934713408
          %v1149 = vunpack.c.0.s8 %v1148
          %v1150 = vperm.slane %v1142, %v1149
          %v1151 = vrot.slane %v1146, 4
          %v1152 = vsel %vm1049, %v1151, %v1134
          %v1153 = vrot.slane %v1134, 4
          %v1154 = vsel %vm1049, %v1146, %v1153
          %v1155 = vrot.slane %v1150, 4
          %v1156 = vsel %vm1049, %v1155, %v1138
          %v1157 = vrot.slane %v1138, 4
          %v1158 = vsel %vm1049, %v1150, %v1157
          %1159 = vst [vmem:[#allocation2] sm:$0xff] %v1152
          %1160 = vst [vmem:[#allocation2 + $0x8] sm:$0xff] %v1154
          %1161 = vst [vmem:[#allocation2 + $0x10] sm:$0xff] %v1156
          %1162 = vst [vmem:[#allocation2 + $0x18] sm:$0xff] %v1158
          %v1163 = vrot.slane %v1026, 4
          %v1164 = vsel %vm1049, %v1163, %v986
          %v1165 = vrot.slane %v986, 4
          %v1166 = vsel %vm1049, %v1026, %v1165
          %v1168 = vunpack.c.l.s4 1983009808
          %v1169 = vunpack.c.0.s8 %v1168
          %v1170 = vperm.slane %v1164, %v1169
          %v1172 = vunpack.c.l.s4 1983009808
          %v1173 = vunpack.c.0.s8 %v1172
          %v1174 = vperm.slane %v1166, %v1173
          %v1175 = vrot.slane %v1046, 4
          %v1176 = vsel %vm1049, %v1175, %v1006
          %v1177 = vrot.slane %v1006, 4
          %v1178 = vsel %vm1049, %v1046, %v1177
          %v1180 = vunpack.c.l.s4 1983009808
          %v1181 = vunpack.c.0.s8 %v1180
          %v1182 = vperm.slane %v1176, %v1181
          %v1184 = vunpack.c.l.s4 1983009808
          %v1185 = vunpack.c.0.s8 %v1184
          %v1186 = vperm.slane %v1178, %v1185
          %v1187 = vrot.slane %v1182, 4
          %v1188 = vsel %vm1049, %v1187, %v1170
          %v1189 = vrot.slane %v1170, 4
          %v1190 = vsel %vm1049, %v1182, %v1189
          %v1192 = vunpack.c.l.s4 1934713408
          %v1193 = vunpack.c.0.s8 %v1192
          %v1194 = vperm.slane %v1188, %v1193
          %v1196 = vunpack.c.l.s4 1934713408
          %v1197 = vunpack.c.0.s8 %v1196
          %v1198 = vperm.slane %v1190, %v1197
          %v1199 = vrot.slane %v1186, 4
          %v1200 = vsel %vm1049, %v1199, %v1174
          %v1201 = vrot.slane %v1174, 4
          %v1202 = vsel %vm1049, %v1186, %v1201
          %v1204 = vunpack.c.l.s4 1934713408
          %v1205 = vunpack.c.0.s8 %v1204
          %v1206 = vperm.slane %v1200, %v1205
          %v1208 = vunpack.c.l.s4 1934713408
          %v1209 = vunpack.c.0.s8 %v1208
          %v1210 = vperm.slane %v1202, %v1209
          %v1211 = vrot.slane %v1194, 4
          %v1212 = vsel %vm1049, 0.0, %v1211
          %v1213 = vrot.slane %v1198, 4
          %v1214 = vsel %vm1049, 0.0, %v1213
          %v1215 = vrot.slane %v1206, 4
          %v1216 = vsel %vm1049, 0.0, %v1215
          %v1217 = vrot.slane %v1210, 4
          %v1218 = vsel %vm1049, 0.0, %v1217
          %v1219 = vsel %vm1049, %v1213, %v1194
          %v1221 = vunpack.c.l.s4 1983009808
          %v1222 = vunpack.c.0.s8 %v1221
          %v1223 = vperm.slane %v1219, %v1222
          %v1224 = vrot.slane %v1214, 4
          %v1225 = vsel %vm1049, %v1224, %v1212
          %v1227 = vunpack.c.l.s4 1983009808
          %v1228 = vunpack.c.0.s8 %v1227
          %v1229 = vperm.slane %v1225, %v1228
          %v1230 = vsel %vm1049, %v1217, %v1206
          %v1232 = vunpack.c.l.s4 1983009808
          %v1233 = vunpack.c.0.s8 %v1232
          %v1234 = vperm.slane %v1230, %v1233
          %v1235 = vrot.slane %v1218, 4
          %v1236 = vsel %vm1049, %v1235, %v1216
          %v1238 = vunpack.c.l.s4 1983009808
          %v1239 = vunpack.c.0.s8 %v1238
          %v1240 = vperm.slane %v1236, %v1239
          %v1241 = vrot.slane %v1229, 4
          %v1242 = vsel %vm1049, %v1241, %v1223
          %v1243 = vrot.slane %v1223, 4
          %v1244 = vsel %vm1049, %v1229, %v1243
          %v1246 = vunpack.c.l.s4 1934713408
          %v1247 = vunpack.c.0.s8 %v1246
          %v1248 = vperm.slane %v1242, %v1247
          %v1250 = vunpack.c.l.s4 1934713408
          %v1251 = vunpack.c.0.s8 %v1250
          %v1252 = vperm.slane %v1244, %v1251
          %v1253 = vrot.slane %v1240, 4
          %v1254 = vsel %vm1049, %v1253, %v1234
          %v1255 = vrot.slane %v1234, 4
          %v1256 = vsel %vm1049, %v1240, %v1255
          %v1258 = vunpack.c.l.s4 1934713408
          %v1259 = vunpack.c.0.s8 %v1258
          %v1260 = vperm.slane %v1254, %v1259
          %v1262 = vunpack.c.l.s4 1934713408
          %v1263 = vunpack.c.0.s8 %v1262
          %v1264 = vperm.slane %v1256, %v1263
          %v1265 = vrot.slane %v1260, 4
          %v1266 = vsel %vm1049, %v1265, %v1248
          %v1267 = vrot.slane %v1248, 4
          %v1268 = vsel %vm1049, %v1260, %v1267
          %v1269 = vrot.slane %v1264, 4
          %v1270 = vsel %vm1049, %v1269, %v1252
          %v1271 = vrot.slane %v1252, 4
          %v1272 = vsel %vm1049, %v1264, %v1271
          %1273 = vst [vmem:[#allocation3] sm:$0xff] %v1266
          %1274 = vst [vmem:[#allocation3 + $0x8] sm:$0xff] %v1268
          %1275 = vst [vmem:[#allocation3 + $0x10] sm:$0xff] %v1270
          %1276 = vst [vmem:[#allocation3 + $0x18] sm:$0xff] %v1272
        $region128: #{tpu_custom_call.1} parent=79 // pred_fallthru
          _
        %v1277 = vld [vmem:[%s617] sm:$0xff]
        %v1278 = vld [vmem:[#allocation10] sm:$0xff]
        %v1279 = vld [vmem:[#allocation10 + $0x8] sm:$0xff]
        %v1280 = vld [vmem:[#allocation10 + $0x10] sm:$0xff]
        %v1281 = vld [vmem:[#allocation10 + $0x18] sm:$0xff]
        %v1282 = vld [vmem:[#allocation10 + $0x20] sm:$0xff]
        %v1283 = vld [vmem:[#allocation10 + $0x28] sm:$0xff]
        %v1284 = vld [vmem:[#allocation10 + $0x30] sm:$0xff]
        %v1285 = vld [vmem:[#allocation10 + $0x38] sm:$0xff]
        %v1286 = vld [vmem:[#allocation10 + $0x40] sm:$0xff]
        %v1287 = vld [vmem:[#allocation10 + $0x48] sm:$0xff]
        %v1288 = vld [vmem:[#allocation10 + $0x50] sm:$0xff]
        %v1289 = vld [vmem:[#allocation10 + $0x58] sm:$0xff]
        %v1290 = vld [vmem:[#allocation10 + $0x60] sm:$0xff]
        %v1291 = vld [vmem:[#allocation10 + $0x68] sm:$0xff]
        %v1292 = vld [vmem:[#allocation10 + $0x70] sm:$0xff]
        %v1293 = vld [vmem:[#allocation10 + $0x78] sm:$0xff]
        %v1294 = vld [vmem:[#allocation10 + $0x80] sm:$0xff]
        %v1295 = vld [vmem:[#allocation10 + $0x88] sm:$0xff]
        %v1296 = vld [vmem:[#allocation10 + $0x90] sm:$0xff]
        %v1297 = vld [vmem:[#allocation10 + $0x98] sm:$0xff]
        %v1298 = vld [vmem:[#allocation10 + $0xa0] sm:$0xff]
        %v1299 = vld [vmem:[#allocation10 + $0xa8] sm:$0xff]
        %v1300 = vld [vmem:[#allocation10 + $0xb0] sm:$0xff]
        %v1301 = vld [vmem:[#allocation10 + $0xb8] sm:$0xff]
        %v1302 = vld [vmem:[#allocation10 + $0xc0] sm:$0xff]
        %v1303 = vld [vmem:[#allocation10 + $0xc8] sm:$0xff]
        %v1304 = vld [vmem:[#allocation10 + $0xd0] sm:$0xff]
        %v1305 = vld [vmem:[#allocation10 + $0xd8] sm:$0xff]
        %v1306 = vld [vmem:[#allocation10 + $0xe0] sm:$0xff]
        %v1307 = vld [vmem:[#allocation10 + $0xe8] sm:$0xff]
        %v1308 = vld [vmem:[#allocation10 + $0xf0] sm:$0xff]
        %v1309 = vld [vmem:[#allocation10 + $0xf8] sm:$0xff]
        %v1310 = vld [vmem:[#allocation10 + $0x100] sm:$0xff]
        %v1311 = vld [vmem:[#allocation10 + $0x108] sm:$0xff]
        %v1312 = vld [vmem:[#allocation10 + $0x110] sm:$0xff]
        %v1313 = vld [vmem:[#allocation10 + $0x118] sm:$0xff]
        %v1314 = vld [vmem:[#allocation10 + $0x120] sm:$0xff]
        %v1315 = vld [vmem:[#allocation10 + $0x128] sm:$0xff]
        %v1316 = vld [vmem:[#allocation10 + $0x130] sm:$0xff]
        %v1317 = vld [vmem:[#allocation10 + $0x138] sm:$0xff]
        %v1318 = vld [vmem:[#allocation10 + $0x140] sm:$0xff]
        %v1319 = vld [vmem:[#allocation10 + $0x148] sm:$0xff]
        %v1320 = vld [vmem:[#allocation10 + $0x150] sm:$0xff]
        %v1321 = vld [vmem:[#allocation10 + $0x158] sm:$0xff]
        %v1322 = vld [vmem:[#allocation10 + $0x160] sm:$0xff]
        %v1323 = vld [vmem:[#allocation10 + $0x168] sm:$0xff]
        %v1324 = vld [vmem:[#allocation10 + $0x170] sm:$0xff]
        %v1325 = vld [vmem:[#allocation10 + $0x178] sm:$0xff]
        %v1326 = vld [vmem:[#allocation10 + $0x180] sm:$0xff]
        %v1327 = vld [vmem:[#allocation10 + $0x188] sm:$0xff]
        %v1328 = vld [vmem:[#allocation10 + $0x190] sm:$0xff]
        %v1329 = vld [vmem:[#allocation10 + $0x198] sm:$0xff]
        %v1330 = vld [vmem:[#allocation10 + $0x1a0] sm:$0xff]
        %v1331 = vld [vmem:[#allocation10 + $0x1a8] sm:$0xff]
        %v1332 = vld [vmem:[#allocation10 + $0x1b0] sm:$0xff]
        %v1333 = vld [vmem:[#allocation10 + $0x1b8] sm:$0xff]
        %v1334 = vld [vmem:[#allocation10 + $0x1c0] sm:$0xff]
        %v1335 = vld [vmem:[#allocation10 + $0x1c8] sm:$0xff]
        %v1336 = vld [vmem:[#allocation10 + $0x1d0] sm:$0xff]
        %v1337 = vld [vmem:[#allocation10 + $0x1d8] sm:$0xff]
        %v1338 = vld [vmem:[#allocation10 + $0x1e0] sm:$0xff]
        %v1339 = vld [vmem:[#allocation10 + $0x1e8] sm:$0xff]
        %v1340 = vld [vmem:[#allocation10 + $0x1f0] sm:$0xff]
        %v1341 = vld [vmem:[#allocation10 + $0x1f8] sm:$0xff]
        %v1342 = vld [vmem:[#allocation12] sm:$0xf]
        %v1344 = vperm.slane %v1342, 0
        %v1345 = vperm.slane %v1342, 1
        %v1346 = vperm.slane %v1342, 2
        %v1347 = vperm.slane %v1342, 3
        %1352 = vmatpush.msra.mxu0 %v1338
        %1353 = vmatpush.msra.mxu0 %v1334
        %1354 = vmatpush.msra.mxu0 %v1330
        %1355 = vmatpush.msra.mxu0 %v1326
        %1356 = vmatpush.msra.mxu0 %v1322
        %1357 = vmatpush.msra.mxu0 %v1318
        %1358 = vmatpush.msra.mxu0 %v1314
        %1359 = vmatpush.msra.mxu0 %v1310
        %1360 = vmatpush.msra.mxu0 %v1306
        %1361 = vmatpush.msra.mxu0 %v1302
        %1362 = vmatpush.msra.mxu0 %v1298
        %1363 = vmatpush.msra.mxu0 %v1294
        %1364 = vmatpush.msra.mxu0 %v1290
        %1365 = vmatpush.msra.mxu0 %v1286
        %1366 = vmatpush.msra.mxu0 %v1282
        %1367 = vmatpush.msra.mxu0 %v1278
        %1368 = vmatmul.f32.gmra.mxu0 %v1277
        %v1369 = vpop.f32.mrf.mxu0
        %v1370 = vadd.f32 %v1344, %v1369
        %1371 = vdwg.mxu0
        %1372 = vmatpush.msra.mxu0 %v1339
        %1373 = vmatpush.msra.mxu0 %v1335
        %1374 = vmatpush.msra.mxu0 %v1331
        %1375 = vmatpush.msra.mxu0 %v1327
        %1376 = vmatpush.msra.mxu0 %v1323
        %1377 = vmatpush.msra.mxu0 %v1319
        %1378 = vmatpush.msra.mxu0 %v1315
        %1379 = vmatpush.msra.mxu0 %v1311
        %1380 = vmatpush.msra.mxu0 %v1307
        %1381 = vmatpush.msra.mxu0 %v1303
        %1382 = vmatpush.msra.mxu0 %v1299
        %1383 = vmatpush.msra.mxu0 %v1295
        %1384 = vmatpush.msra.mxu0 %v1291
        %1385 = vmatpush.msra.mxu0 %v1287
        %1386 = vmatpush.msra.mxu0 %v1283
        %1387 = vmatpush.msra.mxu0 %v1279
        %1388 = vmatmul.f32.gmra.mxu0 %v1277
        %v1389 = vpop.f32.mrf.mxu0
        %v1390 = vadd.f32 %v1345, %v1389
        %1391 = vdwg.mxu0
        %1392 = vmatpush.msra.mxu0 %v1340
        %1393 = vmatpush.msra.mxu0 %v1336
        %1394 = vmatpush.msra.mxu0 %v1332
        %1395 = vmatpush.msra.mxu0 %v1328
        %1396 = vmatpush.msra.mxu0 %v1324
        %1397 = vmatpush.msra.mxu0 %v1320
        %1398 = vmatpush.msra.mxu0 %v1316
        %1399 = vmatpush.msra.mxu0 %v1312
        %1400 = vmatpush.msra.mxu0 %v1308
        %1401 = vmatpush.msra.mxu0 %v1304
        %1402 = vmatpush.msra.mxu0 %v1300
        %1403 = vmatpush.msra.mxu0 %v1296
        %1404 = vmatpush.msra.mxu0 %v1292
        %1405 = vmatpush.msra.mxu0 %v1288
        %1406 = vmatpush.msra.mxu0 %v1284
        %1407 = vmatpush.msra.mxu0 %v1280
        %1408 = vmatmul.f32.gmra.mxu0 %v1277
        %v1409 = vpop.f32.mrf.mxu0
        %v1410 = vadd.f32 %v1346, %v1409
        %1411 = vdwg.mxu0
        %1412 = vmatpush.msra.mxu0 %v1341
        %1413 = vmatpush.msra.mxu0 %v1337
        %1414 = vmatpush.msra.mxu0 %v1333
        %1415 = vmatpush.msra.mxu0 %v1329
        %1416 = vmatpush.msra.mxu0 %v1325
        %1417 = vmatpush.msra.mxu0 %v1321
        %1418 = vmatpush.msra.mxu0 %v1317
        %1419 = vmatpush.msra.mxu0 %v1313
        %1420 = vmatpush.msra.mxu0 %v1309
        %1421 = vmatpush.msra.mxu0 %v1305
        %1422 = vmatpush.msra.mxu0 %v1301
        %1423 = vmatpush.msra.mxu0 %v1297
        %1424 = vmatpush.msra.mxu0 %v1293
        %1425 = vmatpush.msra.mxu0 %v1289
        %1426 = vmatpush.msra.mxu0 %v1285
        %1427 = vmatpush.msra.mxu0 %v1281
        %1428 = vmatmul.f32.gmra.mxu0 %v1277
        %v1429 = vpop.f32.mrf.mxu0
        %v1430 = vadd.f32 %v1347, %v1429
        %1431 = vdwg.mxu0
        %v1432 = vmul.f32 %v1370, 0.35355338
        %v1433 = vmul.f32 %v1390, 0.35355338
        %v1434 = vmul.f32 %v1410, 0.35355338
        %v1435 = vmul.f32 %v1430, 0.35355338
        %v1436 = vrot.slane %v1434, 4
        %vm1437 = vcmask 1047556
        %v1438 = vsel %vm1437, %v1436, %v1432
        %v1439 = vrot.slane %v1432, 4
        %v1440 = vsel %vm1437, %v1434, %v1439
        %v1442 = vunpack.c.l.s4 1983009808
        %v1443 = vunpack.c.0.s8 %v1442
        %v1444 = vperm.slane %v1438, %v1443
        %v1446 = vunpack.c.l.s4 1983009808
        %v1447 = vunpack.c.0.s8 %v1446
        %v1448 = vperm.slane %v1440, %v1447
        %v1449 = vrot.slane %v1435, 4
        %v1450 = vsel %vm1437, %v1449, %v1433
        %v1451 = vrot.slane %v1433, 4
        %v1452 = vsel %vm1437, %v1435, %v1451
        %v1454 = vunpack.c.l.s4 1983009808
        %v1455 = vunpack.c.0.s8 %v1454
        %v1456 = vperm.slane %v1450, %v1455
        %v1458 = vunpack.c.l.s4 1983009808
        %v1459 = vunpack.c.0.s8 %v1458
        %v1460 = vperm.slane %v1452, %v1459
        %v1461 = vrot.slane %v1456, 4
        %v1462 = vsel %vm1437, %v1461, %v1444
        %v1463 = vrot.slane %v1444, 4
        %v1464 = vsel %vm1437, %v1456, %v1463
        %v1466 = vunpack.c.l.s4 1934713408
        %v1467 = vunpack.c.0.s8 %v1466
        %v1468 = vperm.slane %v1462, %v1467
        %v1470 = vunpack.c.l.s4 1934713408
        %v1471 = vunpack.c.0.s8 %v1470
        %v1472 = vperm.slane %v1464, %v1471
        %v1473 = vrot.slane %v1460, 4
        %v1474 = vsel %vm1437, %v1473, %v1448
        %v1475 = vrot.slane %v1448, 4
        %v1476 = vsel %vm1437, %v1460, %v1475
        %v1478 = vunpack.c.l.s4 1934713408
        %v1479 = vunpack.c.0.s8 %v1478
        %v1480 = vperm.slane %v1474, %v1479
        %v1482 = vunpack.c.l.s4 1934713408
        %v1483 = vunpack.c.0.s8 %v1482
        %v1484 = vperm.slane %v1476, %v1483
        %v1485 = vrot.slane %v1468, 4
        %v1486 = vsel %vm1437, 0.0, %v1485
        %v1487 = vrot.slane %v1472, 4
        %v1488 = vsel %vm1437, 0.0, %v1487
        %v1489 = vrot.slane %v1480, 4
        %v1490 = vsel %vm1437, 0.0, %v1489
        %v1491 = vrot.slane %v1484, 4
        %v1492 = vsel %vm1437, 0.0, %v1491
        %v1493 = vsel %vm1437, %v1487, %v1468
        %v1495 = vunpack.c.l.s4 1983009808
        %v1496 = vunpack.c.0.s8 %v1495
        %v1497 = vperm.slane %v1493, %v1496
        %v1498 = vrot.slane %v1488, 4
        %v1499 = vsel %vm1437, %v1498, %v1486
        %v1501 = vunpack.c.l.s4 1983009808
        %v1502 = vunpack.c.0.s8 %v1501
        %v1503 = vperm.slane %v1499, %v1502
        %v1504 = vsel %vm1437, %v1491, %v1480
        %v1506 = vunpack.c.l.s4 1983009808
        %v1507 = vunpack.c.0.s8 %v1506
        %v1508 = vperm.slane %v1504, %v1507
        %v1509 = vrot.slane %v1492, 4
        %v1510 = vsel %vm1437, %v1509, %v1490
        %v1512 = vunpack.c.l.s4 1983009808
        %v1513 = vunpack.c.0.s8 %v1512
        %v1514 = vperm.slane %v1510, %v1513
        %v1515 = vrot.slane %v1503, 4
        %v1516 = vsel %vm1437, %v1515, %v1497
        %v1517 = vrot.slane %v1497, 4
        %v1518 = vsel %vm1437, %v1503, %v1517
        %v1520 = vunpack.c.l.s4 1934713408
        %v1521 = vunpack.c.0.s8 %v1520
        %v1522 = vperm.slane %v1516, %v1521
        %v1524 = vunpack.c.l.s4 1934713408
        %v1525 = vunpack.c.0.s8 %v1524
        %v1526 = vperm.slane %v1518, %v1525
        %v1527 = vrot.slane %v1514, 4
        %v1528 = vsel %vm1437, %v1527, %v1508
        %v1529 = vrot.slane %v1508, 4
        %v1530 = vsel %vm1437, %v1514, %v1529
        %v1532 = vunpack.c.l.s4 1934713408
        %v1533 = vunpack.c.0.s8 %v1532
        %v1534 = vperm.slane %v1528, %v1533
        %v1536 = vunpack.c.l.s4 1934713408
        %v1537 = vunpack.c.0.s8 %v1536
        %v1538 = vperm.slane %v1530, %v1537
        %v1539 = vrot.slane %v1534, 4
        %v1540 = vsel %vm1437, %v1539, %v1522
        %v1541 = vrot.slane %v1522, 4
        %v1542 = vsel %vm1437, %v1534, %v1541
        %v1543 = vrot.slane %v1538, 4
        %v1544 = vsel %vm1437, %v1543, %v1526
        %v1545 = vrot.slane %v1526, 4
        %v1546 = vsel %vm1437, %v1538, %v1545
        %v1547 = vld [vmem:[%s637] sm:$0xf]
        %v1548 = vunpack.c.l.bf16 %v1547
        %v1549 = vld [vmem:[#allocation2] sm:$0xff]
        %v1550 = vld [vmem:[#allocation2 + $0x8] sm:$0xff]
        %v1551 = vld [vmem:[#allocation2 + $0x10] sm:$0xff]
        %v1552 = vld [vmem:[#allocation2 + $0x18] sm:$0xff]
        %v1553 = vld [vmem:[#allocation3] sm:$0xff]
        %v1554 = vld [vmem:[#allocation3 + $0x8] sm:$0xff]
        %v1555 = vld [vmem:[#allocation3 + $0x10] sm:$0xff]
        %v1556 = vld [vmem:[#allocation3 + $0x18] sm:$0xff]
        %1557 = vmatpush.xpose.msra.mxu0 0.0
        %1558 = vmatpush.xpose.msra.mxu0 0.0
        %1559 = vmatpush.xpose.msra.mxu0 0.0
        %1560 = vmatpush.xpose.msra.mxu0 0.0
        %1561 = vmatpush.xpose.msra.mxu0 0.0
        %1562 = vmatpush.xpose.msra.mxu0 0.0
        %1563 = vmatpush.xpose.msra.mxu0 0.0
        %1564 = vmatpush.xpose.msra.mxu0 0.0
        %1565 = vmatpush.xpose.msra.mxu0 0.0
        %1566 = vmatpush.xpose.msra.mxu0 0.0
        %1567 = vmatpush.xpose.msra.mxu0 0.0
        %1568 = vmatpush.xpose.msra.mxu0 0.0
        %1569 = vmatpush.xpose.msra.mxu0 0.0
        %1570 = vmatpush.xpose.msra.mxu0 0.0
        %1571 = vmatpush.xpose.msra.mxu0 0.0
        %1572 = vmatpush.xpose.msra.mxu0 %v1549
        %1573 = vmatmul.f32.gmra.mxu0 %v1540
        %v1574 = vpop.f32.mrf.mxu0
        %v1575 = vadd.f32 %v1548, %v1574
        %1576 = vdwg.mxu0
        %1577 = vmatpush.xpose.msra.mxu0 0.0
        %1578 = vmatpush.xpose.msra.mxu0 0.0
        %1579 = vmatpush.xpose.msra.mxu0 0.0
        %1580 = vmatpush.xpose.msra.mxu0 0.0
        %1581 = vmatpush.xpose.msra.mxu0 0.0
        %1582 = vmatpush.xpose.msra.mxu0 0.0
        %1583 = vmatpush.xpose.msra.mxu0 0.0
        %1584 = vmatpush.xpose.msra.mxu0 0.0
        %1585 = vmatpush.xpose.msra.mxu0 0.0
        %1586 = vmatpush.xpose.msra.mxu0 0.0
        %1587 = vmatpush.xpose.msra.mxu0 0.0
        %1588 = vmatpush.xpose.msra.mxu0 0.0
        %1589 = vmatpush.xpose.msra.mxu0 0.0
        %1590 = vmatpush.xpose.msra.mxu0 0.0
        %1591 = vmatpush.xpose.msra.mxu0 0.0
        %1592 = vmatpush.xpose.msra.mxu0 %v1550
        %1593 = vmatmul.f32.gmra.mxu0 %v1542
        %v1594 = vpop.f32.mrf.mxu0
        %v1595 = vadd.f32 %v1548, %v1594
        %1596 = vdwg.mxu0
        %1597 = vmatpush.xpose.msra.mxu0 0.0
        %1598 = vmatpush.xpose.msra.mxu0 0.0
        %1599 = vmatpush.xpose.msra.mxu0 0.0
        %1600 = vmatpush.xpose.msra.mxu0 0.0
        %1601 = vmatpush.xpose.msra.mxu0 0.0
        %1602 = vmatpush.xpose.msra.mxu0 0.0
        %1603 = vmatpush.xpose.msra.mxu0 0.0
        %1604 = vmatpush.xpose.msra.mxu0 0.0
        %1605 = vmatpush.xpose.msra.mxu0 0.0
        %1606 = vmatpush.xpose.msra.mxu0 0.0
        %1607 = vmatpush.xpose.msra.mxu0 0.0
        %1608 = vmatpush.xpose.msra.mxu0 0.0
        %1609 = vmatpush.xpose.msra.mxu0 0.0
        %1610 = vmatpush.xpose.msra.mxu0 0.0
        %1611 = vmatpush.xpose.msra.mxu0 0.0
        %1612 = vmatpush.xpose.msra.mxu0 %v1551
        %1613 = vmatmul.f32.gmra.mxu0 %v1544
        %v1614 = vpop.f32.mrf.mxu0
        %v1615 = vadd.f32 %v1548, %v1614
        %1616 = vdwg.mxu0
        %1617 = vmatpush.xpose.msra.mxu0 0.0
        %1618 = vmatpush.xpose.msra.mxu0 0.0
        %1619 = vmatpush.xpose.msra.mxu0 0.0
        %1620 = vmatpush.xpose.msra.mxu0 0.0
        %1621 = vmatpush.xpose.msra.mxu0 0.0
        %1622 = vmatpush.xpose.msra.mxu0 0.0
        %1623 = vmatpush.xpose.msra.mxu0 0.0
        %1624 = vmatpush.xpose.msra.mxu0 0.0
        %1625 = vmatpush.xpose.msra.mxu0 0.0
        %1626 = vmatpush.xpose.msra.mxu0 0.0
        %1627 = vmatpush.xpose.msra.mxu0 0.0
        %1628 = vmatpush.xpose.msra.mxu0 0.0
        %1629 = vmatpush.xpose.msra.mxu0 0.0
        %1630 = vmatpush.xpose.msra.mxu0 0.0
        %1631 = vmatpush.xpose.msra.mxu0 0.0
        %1632 = vmatpush.xpose.msra.mxu0 %v1552
        %1633 = vmatmul.f32.gmra.mxu0 %v1546
        %v1634 = vpop.f32.mrf.mxu0
        %v1635 = vadd.f32 %v1548, %v1634
        %1636 = vdwg.mxu0
        %vm1637 = vcmask 64512
        %v1638 = vsel %vm1637, %v1575, -inf
        %1639 = vmax.xlane.f32.xlu0 %v1638
        %v1640 = vpop.xlane.xlu0 %1639
        %v1641 = vsel %vm1637, %v1595, -inf
        %1642 = vmax.xlane.f32.xlu0 %v1641
        %v1643 = vpop.xlane.xlu0 %1642
        %v1644 = vsel %vm1637, %v1615, -inf
        %1645 = vmax.xlane.f32.xlu0 %v1644
        %v1646 = vpop.xlane.xlu0 %1645
        %v1647 = vsel %vm1637, %v1635, -inf
        %1648 = vmax.xlane.f32.xlu0 %v1647
        %v1649 = vpop.xlane.xlu0 %1648
        %v1650 = vsub.f32 -inf, %v1640
        %v1651 = vsub.f32 -inf, %v1643
        %v1652 = vsub.f32 -inf, %v1646
        %v1653 = vsub.f32 -inf, %v1649
        %v1654 = vmul.f32 %v1650, 1.442695
        %v1655 = vpow.pop %v1654
        %v1656 = vmul.f32 %v1651, 1.442695
        %v1657 = vpow.pop %v1656
        %v1658 = vmul.f32 %v1652, 1.442695
        %v1659 = vpow.pop %v1658
        %v1660 = vmul.f32 %v1653, 1.442695
        %v1661 = vpow.pop %v1660
        %v1662 = vsub.f32 %v1575, %v1640
        %v1663 = vsub.f32 %v1595, %v1643
        %v1664 = vsub.f32 %v1615, %v1646
        %v1665 = vsub.f32 %v1635, %v1649
        %v1666 = vmul.f32 %v1662, 1.442695
        %v1667 = vpow.pop %v1666
        %v1668 = vmul.f32 %v1663, 1.442695
        %v1669 = vpow.pop %v1668
        %v1670 = vmul.f32 %v1664, 1.442695
        %v1671 = vpow.pop %v1670
        %v1672 = vmul.f32 %v1665, 1.442695
        %v1673 = vpow.pop %v1672
        %v1674 = vmul.f32 %v1655, 0.0
        %v1675 = vmul.f32 %v1657, 0.0
        %v1676 = vmul.f32 %v1659, 0.0
        %v1677 = vmul.f32 %v1661, 0.0
        %v1678 = vsel %vm1637, %v1667, 0.0
        %1679 = vadd.xlane.f32.xlu0 %v1678
        %v1680 = vpop.xlane.xlu0 %1679
        %v1681 = vsel %vm1637, %v1669, 0.0
        %1682 = vadd.xlane.f32.xlu0 %v1681
        %v1683 = vpop.xlane.xlu0 %1682
        %v1684 = vsel %vm1637, %v1671, 0.0
        %1685 = vadd.xlane.f32.xlu0 %v1684
        %v1686 = vpop.xlane.xlu0 %1685
        %v1687 = vsel %vm1637, %v1673, 0.0
        %1688 = vadd.xlane.f32.xlu0 %v1687
        %v1689 = vpop.xlane.xlu0 %1688
        %v1690 = vadd.f32 %v1674, %v1680
        %v1691 = vadd.f32 %v1675, %v1683
        %v1692 = vadd.f32 %v1676, %v1686
        %v1693 = vadd.f32 %v1677, %v1689
        %v1695 = vsel %vm1637, %v1667, 0
        %1697 = vmatpush.msra.mxu0 0.0
        %1698 = vmatpush.msra.mxu0 0.0
        %1699 = vmatpush.msra.mxu0 0.0
        %1700 = vmatpush.msra.mxu0 0.0
        %1701 = vmatpush.msra.mxu0 0.0
        %1702 = vmatpush.msra.mxu0 0.0
        %1703 = vmatpush.msra.mxu0 0.0
        %1704 = vmatpush.msra.mxu0 0.0
        %1705 = vmatpush.msra.mxu0 0.0
        %1706 = vmatpush.msra.mxu0 0.0
        %1707 = vmatpush.msra.mxu0 0.0
        %1708 = vmatpush.msra.mxu0 0.0
        %1709 = vmatpush.msra.mxu0 0.0
        %1710 = vmatpush.msra.mxu0 0.0
        %1711 = vmatpush.msra.mxu0 0.0
        %1712 = vmatpush.msra.mxu0 %v1553
        %1713 = vmatmul.f32.gmra.mxu0 %v1695
        %v1714 = vpop.f32.mrf.mxu0
        %v1715 = vadd.f32 0.0, %v1714
        %1716 = vdwg.mxu0
        %v1718 = vsel %vm1637, %v1669, 0
        %1720 = vmatpush.msra.mxu0 0.0
        %1721 = vmatpush.msra.mxu0 0.0
        %1722 = vmatpush.msra.mxu0 0.0
        %1723 = vmatpush.msra.mxu0 0.0
        %1724 = vmatpush.msra.mxu0 0.0
        %1725 = vmatpush.msra.mxu0 0.0
        %1726 = vmatpush.msra.mxu0 0.0
        %1727 = vmatpush.msra.mxu0 0.0
        %1728 = vmatpush.msra.mxu0 0.0
        %1729 = vmatpush.msra.mxu0 0.0
        %1730 = vmatpush.msra.mxu0 0.0
        %1731 = vmatpush.msra.mxu0 0.0
        %1732 = vmatpush.msra.mxu0 0.0
        %1733 = vmatpush.msra.mxu0 0.0
        %1734 = vmatpush.msra.mxu0 0.0
        %1735 = vmatpush.msra.mxu0 %v1554
        %1736 = vmatmul.f32.gmra.mxu0 %v1718
        %v1737 = vpop.f32.mrf.mxu0
        %v1738 = vadd.f32 0.0, %v1737
        %1739 = vdwg.mxu0
        %v1741 = vsel %vm1637, %v1671, 0
        %1743 = vmatpush.msra.mxu0 0.0
        %1744 = vmatpush.msra.mxu0 0.0
        %1745 = vmatpush.msra.mxu0 0.0
        %1746 = vmatpush.msra.mxu0 0.0
        %1747 = vmatpush.msra.mxu0 0.0
        %1748 = vmatpush.msra.mxu0 0.0
        %1749 = vmatpush.msra.mxu0 0.0
        %1750 = vmatpush.msra.mxu0 0.0
        %1751 = vmatpush.msra.mxu0 0.0
        %1752 = vmatpush.msra.mxu0 0.0
        %1753 = vmatpush.msra.mxu0 0.0
        %1754 = vmatpush.msra.mxu0 0.0
        %1755 = vmatpush.msra.mxu0 0.0
        %1756 = vmatpush.msra.mxu0 0.0
        %1757 = vmatpush.msra.mxu0 0.0
        %1758 = vmatpush.msra.mxu0 %v1555
        %1759 = vmatmul.f32.gmra.mxu0 %v1741
        %v1760 = vpop.f32.mrf.mxu0
        %v1761 = vadd.f32 0.0, %v1760
        %1762 = vdwg.mxu0
        %v1764 = vsel %vm1637, %v1673, 0
        %1766 = vmatpush.msra.mxu0 0.0
        %1767 = vmatpush.msra.mxu0 0.0
        %1768 = vmatpush.msra.mxu0 0.0
        %1769 = vmatpush.msra.mxu0 0.0
        %1770 = vmatpush.msra.mxu0 0.0
        %1771 = vmatpush.msra.mxu0 0.0
        %1772 = vmatpush.msra.mxu0 0.0
        %1773 = vmatpush.msra.mxu0 0.0
        %1774 = vmatpush.msra.mxu0 0.0
        %1775 = vmatpush.msra.mxu0 0.0
        %1776 = vmatpush.msra.mxu0 0.0
        %1777 = vmatpush.msra.mxu0 0.0
        %1778 = vmatpush.msra.mxu0 0.0
        %1779 = vmatpush.msra.mxu0 0.0
        %1780 = vmatpush.msra.mxu0 0.0
        %1781 = vmatpush.msra.mxu0 %v1556
        %1782 = vmatmul.f32.gmra.mxu0 %v1764
        %v1783 = vpop.f32.mrf.mxu0
        %v1784 = vadd.f32 0.0, %v1783
        %1785 = vdwg.mxu0
        %v1786 = vadd.f32 %v1674, %v1715
        %v1787 = vadd.f32 %v1675, %v1738
        %v1788 = vadd.f32 %v1676, %v1761
        %v1789 = vadd.f32 %v1677, %v1784
        %v1790 = vrcp.pop %v1690
        %v1791 = vrcp.pop %v1691
        %v1792 = vrcp.pop %v1692
        %v1793 = vrcp.pop %v1693
        %v1794 = vmul.f32 %v1690, %v1790
        %v1795 = vmul.f32 %v1691, %v1791
        %v1796 = vmul.f32 %v1692, %v1792
        %v1797 = vmul.f32 %v1693, %v1793
        %v1798 = vsub.f32 2.0, %v1794
        %v1799 = vsub.f32 2.0, %v1795
        %v1800 = vsub.f32 2.0, %v1796
        %v1801 = vsub.f32 2.0, %v1797
        %v1802 = vmul.f32 %v1790, %v1798
        %v1803 = vmul.f32 %v1791, %v1799
        %v1804 = vmul.f32 %v1792, %v1800
        %v1805 = vmul.f32 %v1793, %v1801
        %v1806 = vmul.f32 %v1786, %v1802
        %v1807 = vmul.f32 %v1787, %v1803
        %v1808 = vmul.f32 %v1788, %v1804
        %v1809 = vmul.f32 %v1789, %v1805
        %v1810 = vrot.slane %v1808, 4
        %v1811 = vsel %vm1437, %v1810, %v1806
        %v1812 = vrot.slane %v1806, 4
        %v1813 = vsel %vm1437, %v1808, %v1812
        %v1815 = vunpack.c.l.s4 1983009808
        %v1816 = vunpack.c.0.s8 %v1815
        %v1817 = vperm.slane %v1811, %v1816
        %v1819 = vunpack.c.l.s4 1983009808
        %v1820 = vunpack.c.0.s8 %v1819
        %v1821 = vperm.slane %v1813, %v1820
        %v1822 = vrot.slane %v1809, 4
        %v1823 = vsel %vm1437, %v1822, %v1807
        %v1824 = vrot.slane %v1807, 4
        %v1825 = vsel %vm1437, %v1809, %v1824
        %v1827 = vunpack.c.l.s4 1983009808
        %v1828 = vunpack.c.0.s8 %v1827
        %v1829 = vperm.slane %v1823, %v1828
        %v1831 = vunpack.c.l.s4 1983009808
        %v1832 = vunpack.c.0.s8 %v1831
        %v1833 = vperm.slane %v1825, %v1832
        %v1834 = vrot.slane %v1829, 4
        %v1835 = vsel %vm1437, %v1834, %v1817
        %v1836 = vrot.slane %v1817, 4
        %v1837 = vsel %vm1437, %v1829, %v1836
        %v1839 = vunpack.c.l.s4 1934713408
        %v1840 = vunpack.c.0.s8 %v1839
        %v1841 = vperm.slane %v1835, %v1840
        %v1843 = vunpack.c.l.s4 1934713408
        %v1844 = vunpack.c.0.s8 %v1843
        %v1845 = vperm.slane %v1837, %v1844
        %v1846 = vrot.slane %v1833, 4
        %v1847 = vsel %vm1437, %v1846, %v1821
        %v1848 = vrot.slane %v1821, 4
        %v1849 = vsel %vm1437, %v1833, %v1848
        %v1851 = vunpack.c.l.s4 1934713408
        %v1852 = vunpack.c.0.s8 %v1851
        %v1853 = vperm.slane %v1847, %v1852
        %v1855 = vunpack.c.l.s4 1934713408
        %v1856 = vunpack.c.0.s8 %v1855
        %v1857 = vperm.slane %v1849, %v1856
        %v1858 = vrot.slane %v1841, 4
        %v1859 = vsel %vm1437, 0.0, %v1858
        %v1860 = vrot.slane %v1845, 4
        %v1861 = vsel %vm1437, 0.0, %v1860
        %v1862 = vrot.slane %v1853, 4
        %v1863 = vsel %vm1437, 0.0, %v1862
        %v1864 = vrot.slane %v1857, 4
        %v1865 = vsel %vm1437, 0.0, %v1864
        %v1866 = vsel %vm1437, %v1860, %v1841
        %v1868 = vunpack.c.l.s4 1983009808
        %v1869 = vunpack.c.0.s8 %v1868
        %v1870 = vperm.slane %v1866, %v1869
        %v1871 = vrot.slane %v1861, 4
        %v1872 = vsel %vm1437, %v1871, %v1859
        %v1874 = vunpack.c.l.s4 1983009808
        %v1875 = vunpack.c.0.s8 %v1874
        %v1876 = vperm.slane %v1872, %v1875
        %v1877 = vsel %vm1437, %v1864, %v1853
        %v1879 = vunpack.c.l.s4 1983009808
        %v1880 = vunpack.c.0.s8 %v1879
        %v1881 = vperm.slane %v1877, %v1880
        %v1882 = vrot.slane %v1865, 4
        %v1883 = vsel %vm1437, %v1882, %v1863
        %v1885 = vunpack.c.l.s4 1983009808
        %v1886 = vunpack.c.0.s8 %v1885
        %v1887 = vperm.slane %v1883, %v1886
        %v1888 = vrot.slane %v1876, 4
        %v1889 = vsel %vm1437, %v1888, %v1870
        %v1890 = vrot.slane %v1870, 4
        %v1891 = vsel %vm1437, %v1876, %v1890
        %v1893 = vunpack.c.l.s4 1934713408
        %v1894 = vunpack.c.0.s8 %v1893
        %v1895 = vperm.slane %v1889, %v1894
        %v1897 = vunpack.c.l.s4 1934713408
        %v1898 = vunpack.c.0.s8 %v1897
        %v1899 = vperm.slane %v1891, %v1898
        %v1900 = vrot.slane %v1887, 4
        %v1901 = vsel %vm1437, %v1900, %v1881
        %v1902 = vrot.slane %v1881, 4
        %v1903 = vsel %vm1437, %v1887, %v1902
        %v1905 = vunpack.c.l.s4 1934713408
        %v1906 = vunpack.c.0.s8 %v1905
        %v1907 = vperm.slane %v1901, %v1906
        %v1909 = vunpack.c.l.s4 1934713408
        %v1910 = vunpack.c.0.s8 %v1909
        %v1911 = vperm.slane %v1903, %v1910
        %v1912 = vrot.slane %v1907, 4
        %v1913 = vsel %vm1437, %v1912, %v1895
        %v1914 = vrot.slane %v1895, 4
        %v1915 = vsel %vm1437, %v1907, %v1914
        %v1916 = vrot.slane %v1911, 4
        %v1917 = vsel %vm1437, %v1916, %v1899
        %v1918 = vrot.slane %v1899, 4
        %v1919 = vsel %vm1437, %v1911, %v1918
        %v1920 = vld [vmem:[#allocation18] sm:$0xff]
        %v1921 = vld [vmem:[#allocation18 + $0x8] sm:$0xff]
        %v1922 = vld [vmem:[#allocation18 + $0x10] sm:$0xff]
        %v1923 = vld [vmem:[#allocation18 + $0x18] sm:$0xff]
        %v1924 = vld [vmem:[#allocation18 + $0x20] sm:$0xff]
        %v1925 = vld [vmem:[#allocation18 + $0x28] sm:$0xff]
        %v1926 = vld [vmem:[#allocation18 + $0x30] sm:$0xff]
        %v1927 = vld [vmem:[#allocation18 + $0x38] sm:$0xff]
        %v1928 = vld [vmem:[#allocation18 + $0x40] sm:$0xff]
        %v1929 = vld [vmem:[#allocation18 + $0x48] sm:$0xff]
        %v1930 = vld [vmem:[#allocation18 + $0x50] sm:$0xff]
        %v1931 = vld [vmem:[#allocation18 + $0x58] sm:$0xff]
        %v1932 = vld [vmem:[#allocation18 + $0x60] sm:$0xff]
        %v1933 = vld [vmem:[#allocation18 + $0x68] sm:$0xff]
        %v1934 = vld [vmem:[#allocation18 + $0x70] sm:$0xff]
        %v1935 = vld [vmem:[#allocation18 + $0x78] sm:$0xff]
        %v1936 = vld [vmem:[#allocation18 + $0x80] sm:$0xff]
        %v1937 = vld [vmem:[#allocation18 + $0x88] sm:$0xff]
        %v1938 = vld [vmem:[#allocation18 + $0x90] sm:$0xff]
        %v1939 = vld [vmem:[#allocation18 + $0x98] sm:$0xff]
        %v1940 = vld [vmem:[#allocation18 + $0xa0] sm:$0xff]
        %v1941 = vld [vmem:[#allocation18 + $0xa8] sm:$0xff]
        %v1942 = vld [vmem:[#allocation18 + $0xb0] sm:$0xff]
        %v1943 = vld [vmem:[#allocation18 + $0xb8] sm:$0xff]
        %v1944 = vld [vmem:[#allocation18 + $0xc0] sm:$0xff]
        %v1945 = vld [vmem:[#allocation18 + $0xc8] sm:$0xff]
        %v1946 = vld [vmem:[#allocation18 + $0xd0] sm:$0xff]
        %v1947 = vld [vmem:[#allocation18 + $0xd8] sm:$0xff]
        %v1948 = vld [vmem:[#allocation18 + $0xe0] sm:$0xff]
        %v1949 = vld [vmem:[#allocation18 + $0xe8] sm:$0xff]
        %v1950 = vld [vmem:[#allocation18 + $0xf0] sm:$0xff]
        %v1951 = vld [vmem:[#allocation18 + $0xf8] sm:$0xff]
        %v1952 = vld [vmem:[#allocation18 + $0x100] sm:$0xff]
        %v1953 = vld [vmem:[#allocation18 + $0x108] sm:$0xff]
        %v1954 = vld [vmem:[#allocation18 + $0x110] sm:$0xff]
        %v1955 = vld [vmem:[#allocation18 + $0x118] sm:$0xff]
        %v1956 = vld [vmem:[#allocation18 + $0x120] sm:$0xff]
        %v1957 = vld [vmem:[#allocation18 + $0x128] sm:$0xff]
        %v1958 = vld [vmem:[#allocation18 + $0x130] sm:$0xff]
        %v1959 = vld [vmem:[#allocation18 + $0x138] sm:$0xff]
        %v1960 = vld [vmem:[#allocation18 + $0x140] sm:$0xff]
        %v1961 = vld [vmem:[#allocation18 + $0x148] sm:$0xff]
        %v1962 = vld [vmem:[#allocation18 + $0x150] sm:$0xff]
        %v1963 = vld [vmem:[#allocation18 + $0x158] sm:$0xff]
        %v1964 = vld [vmem:[#allocation18 + $0x160] sm:$0xff]
        %v1965 = vld [vmem:[#allocation18 + $0x168] sm:$0xff]
        %v1966 = vld [vmem:[#allocation18 + $0x170] sm:$0xff]
        %v1967 = vld [vmem:[#allocation18 + $0x178] sm:$0xff]
        %v1968 = vld [vmem:[#allocation18 + $0x180] sm:$0xff]
        %v1969 = vld [vmem:[#allocation18 + $0x188] sm:$0xff]
        %v1970 = vld [vmem:[#allocation18 + $0x190] sm:$0xff]
        %v1971 = vld [vmem:[#allocation18 + $0x198] sm:$0xff]
        %v1972 = vld [vmem:[#allocation18 + $0x1a0] sm:$0xff]
        %v1973 = vld [vmem:[#allocation18 + $0x1a8] sm:$0xff]
        %v1974 = vld [vmem:[#allocation18 + $0x1b0] sm:$0xff]
        %v1975 = vld [vmem:[#allocation18 + $0x1b8] sm:$0xff]
        %v1976 = vld [vmem:[#allocation18 + $0x1c0] sm:$0xff]
        %v1977 = vld [vmem:[#allocation18 + $0x1c8] sm:$0xff]
        %v1978 = vld [vmem:[#allocation18 + $0x1d0] sm:$0xff]
        %v1979 = vld [vmem:[#allocation18 + $0x1d8] sm:$0xff]
        %v1980 = vld [vmem:[#allocation18 + $0x1e0] sm:$0xff]
        %v1981 = vld [vmem:[#allocation18 + $0x1e8] sm:$0xff]
        %v1982 = vld [vmem:[#allocation18 + $0x1f0] sm:$0xff]
        %v1983 = vld [vmem:[#allocation18 + $0x1f8] sm:$0xff]
        %v1984 = vld [vmem:[%s10] sm:$0x1]
        %v1986 = vperm.slane %v1984, 0
        %1988 = vmatpush.msra.mxu0 %v1935
        %1989 = vmatpush.msra.mxu0 %v1934
        %1990 = vmatpush.msra.mxu0 %v1933
        %1991 = vmatpush.msra.mxu0 %v1932
        %1992 = vmatpush.msra.mxu0 %v1931
        %1993 = vmatpush.msra.mxu0 %v1930
        %1994 = vmatpush.msra.mxu0 %v1929
        %1995 = vmatpush.msra.mxu0 %v1928
        %1996 = vmatpush.msra.mxu0 %v1927
        %1997 = vmatpush.msra.mxu0 %v1926
        %1998 = vmatpush.msra.mxu0 %v1925
        %1999 = vmatpush.msra.mxu0 %v1924
        %2000 = vmatpush.msra.mxu0 %v1923
        %2001 = vmatpush.msra.mxu0 %v1922
        %2002 = vmatpush.msra.mxu0 %v1921
        %2003 = vmatpush.msra.mxu0 %v1920
        %2004 = vmatmul.f32.gmra.mxu0 %v1913
        %v2005 = vpop.f32.mrf.mxu0
        %v2006 = vadd.f32 %v1986, %v2005
        %2007 = vdwg.mxu0
        %2008 = vmatpush.msra.mxu0 %v1951
        %2009 = vmatpush.msra.mxu0 %v1950
        %2010 = vmatpush.msra.mxu0 %v1949
        %2011 = vmatpush.msra.mxu0 %v1948
        %2012 = vmatpush.msra.mxu0 %v1947
        %2013 = vmatpush.msra.mxu0 %v1946
        %2014 = vmatpush.msra.mxu0 %v1945
        %2015 = vmatpush.msra.mxu0 %v1944
        %2016 = vmatpush.msra.mxu0 %v1943
        %2017 = vmatpush.msra.mxu0 %v1942
        %2018 = vmatpush.msra.mxu0 %v1941
        %2019 = vmatpush.msra.mxu0 %v1940
        %2020 = vmatpush.msra.mxu0 %v1939
        %2021 = vmatpush.msra.mxu0 %v1938
        %2022 = vmatpush.msra.mxu0 %v1937
        %2023 = vmatpush.msra.mxu0 %v1936
        %2024 = vmatmul.f32.gmra.mxu0 %v1915
        %v2025 = vpop.f32.mrf.mxu0
        %v2026 = vadd.f32 %v2006, %v2025
        %2027 = vdwg.mxu0
        %2028 = vmatpush.msra.mxu0 %v1967
        %2029 = vmatpush.msra.mxu0 %v1966
        %2030 = vmatpush.msra.mxu0 %v1965
        %2031 = vmatpush.msra.mxu0 %v1964
        %2032 = vmatpush.msra.mxu0 %v1963
        %2033 = vmatpush.msra.mxu0 %v1962
        %2034 = vmatpush.msra.mxu0 %v1961
        %2035 = vmatpush.msra.mxu0 %v1960
        %2036 = vmatpush.msra.mxu0 %v1959
        %2037 = vmatpush.msra.mxu0 %v1958
        %2038 = vmatpush.msra.mxu0 %v1957
        %2039 = vmatpush.msra.mxu0 %v1956
        %2040 = vmatpush.msra.mxu0 %v1955
        %2041 = vmatpush.msra.mxu0 %v1954
        %2042 = vmatpush.msra.mxu0 %v1953
        %2043 = vmatpush.msra.mxu0 %v1952
        %2044 = vmatmul.f32.gmra.mxu0 %v1917
        %v2045 = vpop.f32.mrf.mxu0
        %v2046 = vadd.f32 %v2026, %v2045
        %2047 = vdwg.mxu0
        %2048 = vmatpush.msra.mxu0 %v1983
        %2049 = vmatpush.msra.mxu0 %v1982
        %2050 = vmatpush.msra.mxu0 %v1981
        %2051 = vmatpush.msra.mxu0 %v1980
        %2052 = vmatpush.msra.mxu0 %v1979
        %2053 = vmatpush.msra.mxu0 %v1978
        %2054 = vmatpush.msra.mxu0 %v1977
        %2055 = vmatpush.msra.mxu0 %v1976
        %2056 = vmatpush.msra.mxu0 %v1975
        %2057 = vmatpush.msra.mxu0 %v1974
        %2058 = vmatpush.msra.mxu0 %v1973
        %2059 = vmatpush.msra.mxu0 %v1972
        %2060 = vmatpush.msra.mxu0 %v1971
        %2061 = vmatpush.msra.mxu0 %v1970
        %2062 = vmatpush.msra.mxu0 %v1969
        %2063 = vmatpush.msra.mxu0 %v1968
        %2064 = vmatmul.f32.gmra.mxu0 %v1919
        %v2065 = vpop.f32.mrf.mxu0
        %v2066 = vadd.f32 %v2046, %v2065
        %2067 = vdwg.mxu0
        %v2068 = vadd.f32 %v2066, %v1277
        %2069 = vadd.xlane.f32.xlu0 %v2068
        %v2070 = vpop.xlane.xlu0 %2069
        %v2071 = vmul.f32 %v2070, 0.03125
        %v2072 = vsub.f32 %v2068, %v2071
        %v2073 = vlaneseq
        %v2074 = vand.u32 %v2073, 127
        %vm2075 = vcmp.lt.s32.totalorder %v2074, 32
        %v2076 = vsel %vm2075, 1, 0
        %v2077 = vcvt.s32.f32 %v2076
        %v2078 = vmul.f32 %v2072, %v2077
        %v2079 = vmul.f32 %v2078, %v2078
        %2080 = vadd.xlane.f32.xlu0 %v2079
        %v2081 = vpop.xlane.xlu0 %2080
        %v2082 = vmul.f32 %v2081, 0.03125
        %v2083 = vadd.f32 %v2082, 1e-12
        %v2084 = vrsqrt.pop %v2083
        %v2085 = vmul.f32 %v2084, %v2083
        %v2086 = vmul.f32 %v2085, %v2084
        %v2087 = vmul.f32 0.5, %v2086
        %v2088 = vsub.f32 1.5, %v2087
        %v2089 = vmul.f32 %v2084, %v2088
        %vm2090 = vweird.f32 %v2083
        %vm2091 = vweird.f32 %v2084
        %vm2092 = vmor %vm2090, %vm2091
        %v2093 = vsel %vm2092, %v2084, %v2089
        %v2094 = vmul.f32 %v2078, %v2093
        %v2095 = vld [vmem:[#allocation19] sm:$0xff]
        %v2096 = vld [vmem:[#allocation19 + $0x8] sm:$0xff]
        %v2097 = vld [vmem:[#allocation19 + $0x10] sm:$0xff]
        %v2098 = vld [vmem:[#allocation19 + $0x18] sm:$0xff]
        %v2099 = vld [vmem:[#allocation19 + $0x20] sm:$0xff]
        %v2100 = vld [vmem:[#allocation19 + $0x28] sm:$0xff]
        %v2101 = vld [vmem:[#allocation19 + $0x30] sm:$0xff]
        %v2102 = vld [vmem:[#allocation19 + $0x38] sm:$0xff]
        %v2103 = vld [vmem:[#allocation19 + $0x40] sm:$0xff]
        %v2104 = vld [vmem:[#allocation19 + $0x48] sm:$0xff]
        %v2105 = vld [vmem:[#allocation19 + $0x50] sm:$0xff]
        %v2106 = vld [vmem:[#allocation19 + $0x58] sm:$0xff]
        %v2107 = vld [vmem:[#allocation19 + $0x60] sm:$0xff]
        %v2108 = vld [vmem:[#allocation19 + $0x68] sm:$0xff]
        %v2109 = vld [vmem:[#allocation19 + $0x70] sm:$0xff]
        %v2110 = vld [vmem:[#allocation19 + $0x78] sm:$0xff]
        %v2111 = vld [vmem:[%s12] sm:$0x1]
        %v2113 = vperm.slane %v2111, 0
        %2115 = vmatpush.msra.mxu0 %v2110
        %2116 = vmatpush.msra.mxu0 %v2109
        %2117 = vmatpush.msra.mxu0 %v2108
        %2118 = vmatpush.msra.mxu0 %v2107
        %2119 = vmatpush.msra.mxu0 %v2106
        %2120 = vmatpush.msra.mxu0 %v2105
        %2121 = vmatpush.msra.mxu0 %v2104
        %2122 = vmatpush.msra.mxu0 %v2103
        %2123 = vmatpush.msra.mxu0 %v2102
        %2124 = vmatpush.msra.mxu0 %v2101
        %2125 = vmatpush.msra.mxu0 %v2100
        %2126 = vmatpush.msra.mxu0 %v2099
        %2127 = vmatpush.msra.mxu0 %v2098
        %2128 = vmatpush.msra.mxu0 %v2097
        %2129 = vmatpush.msra.mxu0 %v2096
        %2130 = vmatpush.msra.mxu0 %v2095
        %2131 = vmatmul.f32.gmra.mxu0 %v2094
        %v2132 = vpop.f32.mrf.mxu0
        %v2133 = vadd.f32 %v2113, %v2132
        %2134 = vdwg.mxu0
        %v2135 = vmax.f32 %v2133, 0.0
        %v2136 = vld [vmem:[#allocation21] sm:$0xff]
        %v2137 = vld [vmem:[#allocation21 + $0x8] sm:$0xff]
        %v2138 = vld [vmem:[#allocation21 + $0x10] sm:$0xff]
        %v2139 = vld [vmem:[#allocation21 + $0x18] sm:$0xff]
        %v2140 = vld [vmem:[#allocation21 + $0x20] sm:$0xff]
        %v2141 = vld [vmem:[#allocation21 + $0x28] sm:$0xff]
        %v2142 = vld [vmem:[#allocation21 + $0x30] sm:$0xff]
        %v2143 = vld [vmem:[#allocation21 + $0x38] sm:$0xff]
        %v2144 = vld [vmem:[#allocation21 + $0x40] sm:$0xff]
        %v2145 = vld [vmem:[#allocation21 + $0x48] sm:$0xff]
        %v2146 = vld [vmem:[#allocation21 + $0x50] sm:$0xff]
        %v2147 = vld [vmem:[#allocation21 + $0x58] sm:$0xff]
        %v2148 = vld [vmem:[#allocation21 + $0x60] sm:$0xff]
        %v2149 = vld [vmem:[#allocation21 + $0x68] sm:$0xff]
        %v2150 = vld [vmem:[#allocation21 + $0x70] sm:$0xff]
        %v2151 = vld [vmem:[#allocation21 + $0x78] sm:$0xff]
        %v2152 = vld [vmem:[%s14] sm:$0x1]
        %v2154 = vperm.slane %v2152, 0
        %2156 = vmatpush.msra.mxu0 %v2151
        %2157 = vmatpush.msra.mxu0 %v2150
        %2158 = vmatpush.msra.mxu0 %v2149
        %2159 = vmatpush.msra.mxu0 %v2148
        %2160 = vmatpush.msra.mxu0 %v2147
        %2161 = vmatpush.msra.mxu0 %v2146
        %2162 = vmatpush.msra.mxu0 %v2145
        %2163 = vmatpush.msra.mxu0 %v2144
        %2164 = vmatpush.msra.mxu0 %v2143
        %2165 = vmatpush.msra.mxu0 %v2142
        %2166 = vmatpush.msra.mxu0 %v2141
        %2167 = vmatpush.msra.mxu0 %v2140
        %2168 = vmatpush.msra.mxu0 %v2139
        %2169 = vmatpush.msra.mxu0 %v2138
        %2170 = vmatpush.msra.mxu0 %v2137
        %2171 = vmatpush.msra.mxu0 %v2136
        %2172 = vmatmul.f32.gmra.mxu0 %v2135
        %v2173 = vpop.f32.mrf.mxu0
        %v2174 = vadd.f32 %v2154, %v2173
        %2175 = vdwg.mxu0
        %v2176 = vadd.f32 %v2174, %v2094
        %2177 = vadd.xlane.f32.xlu0 %v2176
        %v2178 = vpop.xlane.xlu0 %2177
        %v2179 = vmul.f32 %v2178, 0.03125
        %v2180 = vsub.f32 %v2176, %v2179
        %v2181 = vmul.f32 %v2180, %v2077
        %v2182 = vmul.f32 %v2181, %v2181
        %2183 = vadd.xlane.f32.xlu0 %v2182
        %v2184 = vpop.xlane.xlu0 %2183
        %v2185 = vmul.f32 %v2184, 0.03125
        %v2186 = vadd.f32 %v2185, 1e-12
        %v2187 = vrsqrt.pop %v2186
        %v2188 = vmul.f32 %v2187, %v2186
        %v2189 = vmul.f32 %v2188, %v2187
        %v2190 = vmul.f32 0.5, %v2189
        %v2191 = vsub.f32 1.5, %v2190
        %v2192 = vmul.f32 %v2187, %v2191
        %vm2193 = vweird.f32 %v2186
        %vm2194 = vweird.f32 %v2187
        %vm2195 = vmor %vm2193, %vm2194
        %v2196 = vsel %vm2195, %v2187, %v2192
        %v2197 = vmul.f32 %v2181, %v2196
        %2198 = vst [vmem:[%s734] sm:$0xff] %v2197
        %s2199 = sand.u32 %s395, 1
        %s2200 = scalar_lea.sflag [#allocation6], %s2199
        %s2201 = sand.u32 %s395, 1
        %s2202 = smul.addr %s2201, 8
        %s2203 = scalar_lea.vmem [#allocation22], %s2202
        // Predicated region
        $region129: #{tpu_custom_call.1} parent=79 // pred_check
          %p2204 = pneg %p405
        $region130: #{tpu_custom_call.1} parent=79 // pred_check_branch
          %2206 = sbr.rel (%p2204) target = $region132
        $region131: #{tpu_custom_call.1} parent=79 // pred_region
          %2208 = vsyncadd %s2200, 0
          %s2209 = sadd.s32 %s44, %s43
          %s2210 = smul.addr %s2209, 8
          %s2211 = scalar_lea.hbm %s15, %s2210
          %s2213 = sshll.u32 %s2203, 4
          %s2214 = int_to_ptr.vmem [resolvable:$true] %s2213
          %s2215 = sshll.u32 %s2211, 4
          %s2216 = int_to_ptr.hbm [resolvable:$true] %s2215
          %2218 = dma.vmem_to_hbm [thread:$0]  %s2214, 128, %s2216, %s2200
        $region132: #{tpu_custom_call.1} parent=79 // pred_fallthru
          _
      $region80: #{tpu_custom_call.1} parent=5 // pred_fallthru
        _
      %p2219 = scmp.le.s32.totalorder 2, %s34
      // Predicated region
      $region133: #{tpu_custom_call.1} parent=5 // pred_check
        %p2220 = pneg %p2219
      $region134: #{tpu_custom_call.1} parent=5 // pred_check_branch
        %2222 = sbr.rel (%p2220) target = $region136
      $region135: #{tpu_custom_call.1} parent=5 // pred_region
        %s2223 = ssub.s32 %s34, 2
        // Predicated region
        $region137: #{tpu_custom_call.1} parent=135 // pred_check
          %p2224 = pneg %p411
        $region138: #{tpu_custom_call.1} parent=135 // pred_check_branch
          %2226 = sbr.rel (%p2224) target = $region140
        $region139: #{tpu_custom_call.1} parent=135 // pred_region
          %s2227 = sand.u32 %s396, 1
          %s2228 = scalar_lea.sflag [#allocation6], %s2227
          %s2229 = sand.u32 %s396, 1
          %s2230 = smul.addr %s2229, 8
          %s2231 = scalar_lea.vmem [#allocation22], %s2230
          %2233 = dma.done %s2228, 128
        $region140: #{tpu_custom_call.1} parent=135 // pred_fallthru
          _
      $region136: #{tpu_custom_call.1} parent=5 // pred_fallthru
        _
    $region6: #{tpu_custom_call.1} parent=1 // loop_footer
      %s38 = sadd.s32 1, %s34
    $region7: #{tpu_custom_call.1} parent=1 // loop_footer_branch
      %33 = sbr.rel target = $region3
    $region8: #{tpu_custom_call.1} parent=1 // loop_exit
      _
    %2234 = vsyncpa [#allocation5], 1
    %s2235 = scalar_lea.sflag [#allocation5], 1
    %2236 = vsyncpa %s2235, 1
    %2237 = vsyncpa [#allocation8], 1
    %s2238 = scalar_lea.sflag [#allocation8], 1
    %2239 = vsyncpa %s2238, 1
    %2240 = vsyncpa [#allocation11], 1
    %2241 = vsyncpa [#allocation14], 1
    %2242 = vsyncpa [#allocation17], 1
    %2243 = vsyncpa [#allocation20], 1
    %2244 = vsyncpa [#allocation6], 1
    %s2245 = scalar_lea.sflag [#allocation6], 1
    %2246 = vsyncpa %s2245, 1

</llo_original>
